<compile_context>
chip_gen: v5e
topology: v5e:2x2
jax: 0.10.0
libtpu: 0.0.40
codegen_flags: <defaults>
</compile_context>

<pallas_src>
import jax
import jax.numpy as jnp
from jax.experimental import pallas as pl
from jax.experimental.pallas import tpu as pltpu


def _round_up(n, m):
    return ((n + m - 1) // m) * m


def _pad2(a, rows, cols):
    r, c = a.shape
    return jnp.pad(a, ((0, rows - r), (0, cols - c)))


# ---------------------------------------------------------------------------
# Pallas kernel: full forward pass for one batch tile
# ---------------------------------------------------------------------------
def _make_kernel(compute_dtype):
    def vae_fwd_kernel(
        # per-tile data
        x_ref, v_ref, eps_a_ref, eps_v_ref,
        # VMEM-resident (lane-padded / fused) weights
        w_encX_ref, b_encX_ref,
        w_sa_ref, b_sa_ref,          # fused [mean | logvar] (audio)
        w_encV0_ref, b_encV0_ref,    # bf16 weight (dominant matmul)
        w_ve_ref, b_ve_ref,          # fused [encoder_layerV | decoder_layerV]
        w_sv_ref, b_sv_ref,          # fused [mean | logvar] (video)
        w_decZ_ref, b_decZ_ref,
        w_out_ref, b_out_ref,
        # per-tile outputs
        out_a_ref, stats_a_ref, out_v_ref, stats_v_ref,
    ):
        f32 = jnp.float32
        hpad = w_decZ_ref.shape[1]               # 128-aligned hidden segment
        lat_seg = stats_a_ref.shape[1] // 2      # 128-aligned latent segment

        def mm(a, w_ref):
            # MXU matmul, f32 accumulation; operand dtypes come from storage.
            return jnp.dot(a, w_ref[...], preferred_element_type=f32)

        # ----- encodeA: he = tanh(encoder_layerX(x)), fused mean|logvar -----
        he_a = jnp.tanh(mm(x_ref[...], w_encX_ref) + b_encX_ref[...])
        stats_a = mm(he_a, w_sa_ref) + b_sa_ref[...]        # [TB, 2*LAT_SEG]
        stats_a_ref[...] = stats_a
        mu_a = stats_a[:, :lat_seg]                         # lane-aligned split
        z_a = eps_a_ref[...] * jnp.exp(0.5 * stats_a[:, lat_seg:]) + mu_a

        # ----- shared video embedding (dominant matmul, bf16 operands) -----
        ve = jnp.maximum(mm(v_ref[...], w_encV0_ref) + b_encV0_ref[...], 0.0)

        # ----- fused encoder_layerV | decoder_layerV: one MXU pass over ve ---
        ve_c = ve.astype(compute_dtype)          # no-op when compute_dtype=f32
        ve_proj = mm(ve_c, w_ve_ref) + b_ve_ref[...]        # [TB, 2*HPAD]
        he_v = jnp.tanh(ve_proj[:, :hpad])
        dec_base = ve_proj[:, hpad:] + b_decZ_ref[...]      # decV(ve)+b_decV+b_decZ

        # ----- encodeV stats + reparameterize -----
        stats_v = mm(he_v, w_sv_ref) + b_sv_ref[...]
        stats_v_ref[...] = stats_v
        mu_v = stats_v[:, :lat_seg]
        z_v = eps_v_ref[...] * jnp.exp(0.5 * stats_v[:, lat_seg:]) + mu_v

        # ----- decode(z_a, v) and decode(z_v, v): no batch-axis stacking -----
        hd_a = jnp.tanh(mm(z_a, w_decZ_ref) + dec_base)
        out_a_ref[...] = jnp.exp(mm(hd_a, w_out_ref) + b_out_ref[...])

        hd_v = jnp.tanh(mm(z_v, w_decZ_ref) + dec_base)
        out_v_ref[...] = jnp.exp(mm(hd_v, w_out_ref) + b_out_ref[...])

    return vae_fwd_kernel


# ---------------------------------------------------------------------------
# One-time weight preparation (fuse + pad + cast).  Call once, reuse per step.
# ---------------------------------------------------------------------------
def prepare_weights(params, compute_dtype=jnp.bfloat16):
    f32 = jnp.float32
    input_dim, hidden_dim = params["w_encX"].shape
    latent_dim = params["w_ma"].shape[1]
    landmarks_dim, mid_dim = params["w_encV0"].shape     # mid_dim = 512

    HPAD = _round_up(hidden_dim, 128)
    LAT_SEG = _round_up(latent_dim, 128)
    OUTPAD = _round_up(input_dim, 128)
    LMPAD = _round_up(landmarks_dim, 128)                # real model: 4489 -> 4608

    def fuse_cols(w0, b0, w1, b1, k, seg):
        # [w0 | w1] placed in two 128-lane-aligned column segments, shared K.
        w = jnp.zeros((k, 2 * seg), f32)
        w = w.at[:w0.shape[0], :w0.shape[1]].set(w0)
        w = w.at[:w1.shape[0], seg:seg + w1.shape[1]].set(w1)
        b = jnp.zeros((1, 2 * seg), f32)
        b = b.at[:, :b0.shape[1]].set(b0)
        b = b.at[:, seg:seg + b1.shape[1]].set(b1)
        return w, b

    # audio encoder (f32, tiny)
    w_encX = _pad2(params["w_encX"], input_dim, HPAD)
    b_encX = _pad2(params["b_encX"], 1, HPAD)
    w_sa, b_sa = fuse_cols(params["w_ma"], params["b_ma"],
                           params["w_la"], params["b_la"], HPAD, LAT_SEG)
    w_sv, b_sv = fuse_cols(params["w_mv"], params["b_mv"],
                           params["w_lv"], params["b_lv"], HPAD, LAT_SEG)

    # dominant weight: K padded to 128 multiple, stored in compute_dtype (bf16)
    w_encV0 = _pad2(params["w_encV0"], LMPAD, mid_dim).astype(compute_dtype)
    b_encV0 = params["b_encV0"].astype(f32)

    # fused [encoder_layerV | decoder_layerV] on ve, stored in compute_dtype
    w_ve, b_ve = fuse_cols(params["w_encV"], params["b_encV"],
                           params["w_decV"], params["b_decV"], mid_dim, HPAD)
    w_ve = w_ve.astype(compute_dtype)

    # decoder (f32: feeds exp() output and is negligible MXU work)
    w_decZ = _pad2(params["w_decZ"], LAT_SEG, HPAD)
    b_decZ = _pad2(params["b_decZ"], 1, HPAD)
    w_out = _pad2(params["w_out"], HPAD, OUTPAD)
    b_out = _pad2(params["b_out"], 1, OUTPAD)

    weights = (w_encX, b_encX, w_sa, b_sa, w_encV0, b_encV0, w_ve, b_ve,
               w_sv, b_sv, w_decZ, b_decZ, w_out, b_out)
    dims = dict(input_dim=input_dim, hidden_dim=hidden_dim, latent_dim=latent_dim,
                landmarks_dim=landmarks_dim, mid_dim=mid_dim,
                HPAD=HPAD, LAT_SEG=LAT_SEG, OUTPAD=OUTPAD, LMPAD=LMPAD)
    priors = (params["mupA"], params["sigpA"], params["mupV"], params["sigpV"])
    return dict(weights=weights, dims=dims, priors=priors,
                compute_dtype=compute_dtype)


# ---------------------------------------------------------------------------
# Forward wrapper: batch tiling, BlockSpecs, padded-output slicing
# ---------------------------------------------------------------------------
def vae_forward(x, v, eps_a, eps_v, prepared):
    f32 = jnp.float32
    d = prepared["dims"]
    weights = prepared["weights"]
    compute_dtype = prepared["compute_dtype"]
    B = x.shape[0]
    input_dim, latent_dim = d["input_dim"], d["latent_dim"]
    HPAD, LAT_SEG, OUTPAD, LMPAD = d["HPAD"], d["LAT_SEG"], d["OUTPAD"], d["LMPAD"]
    mid_dim = d["mid_dim"]

    # ---- batch tiling: sublane-aligned tiles; keep grid >= 2 when there is
    # enough work so both v7x TensorCores get a share via "parallel". ----
    B8 = _round_up(max(B, 8), 8)
    if B8 >= 16:
        TB = min(256, _round_up(pl.cdiv(B8, 2), 8))
    else:
        TB = B8
    BPAD = _round_up(B8, TB)
    grid = (BPAD // TB,)

    x_p = _pad2(x.astype(f32), BPAD, input_dim)
    v_p = _pad2(v.astype(compute_dtype), BPAD, LMPAD)      # bf16 in HBM
    eps_a_p = _pad2(eps_a.astype(f32), BPAD, LAT_SEG)
    eps_v_p = _pad2(eps_v.astype(f32), BPAD, LAT_SEG)

    def data_spec(feat):
        return pl.BlockSpec((TB, feat), lambda i: (i, 0))

    def const_spec(shape):
        return pl.BlockSpec(shape, lambda i: (0, 0))

    in_specs = ([data_spec(input_dim),       # x
                 data_spec(LMPAD),           # v (bf16, K lane-padded)
                 data_spec(LAT_SEG),         # eps_a
                 data_spec(LAT_SEG)]         # eps_v
                + [const_spec(w.shape) for w in weights])

    out_specs = [data_spec(OUTPAD),          # decode(z_a, v)
                 data_spec(2 * LAT_SEG),     # [mu_a | logvar_a]
                 data_spec(OUTPAD),          # decode(z_v, v)
                 data_spec(2 * LAT_SEG)]     # [mu_v | logvar_v]

    out_shapes = (jax.ShapeDtypeStruct((BPAD, OUTPAD), f32),
                  jax.ShapeDtypeStruct((BPAD, 2 * LAT_SEG), f32),
                  jax.ShapeDtypeStruct((BPAD, OUTPAD), f32),
                  jax.ShapeDtypeStruct((BPAD, 2 * LAT_SEG), f32))

    # ---- VMEM budget from the actual footprint (weights + double-buffered
    # data/output blocks), capped below v7x's 64 MiB with headroom ----
    weight_bytes = sum(int(w.size) * jnp.dtype(w.dtype).itemsize for w in weights)
    in_block = (TB * input_dim * 4
                + TB * LMPAD * jnp.dtype(compute_dtype).itemsize
                + 2 * TB * LAT_SEG * 4)
    out_block = TB * (2 * OUTPAD + 4 * LAT_SEG) * 4
    vmem_bytes = int(2 * weight_bytes + 2 * (in_block + out_block) + (6 << 20))
    vmem_bytes = min(max(vmem_bytes, 16 << 20), 56 << 20)

    # ---- advisory cost estimate for the XLA scheduler ----
    mnk = (input_dim * HPAD
           + 2 * (HPAD * 2 * LAT_SEG)        # fused stats (a + v)
           + LMPAD * mid_dim                 # encV0 (dominant)
           + mid_dim * 2 * HPAD              # fused encV | decV
           + 2 * (LAT_SEG * HPAD)            # decZ for z_a and z_v
           + 2 * (HPAD * OUTPAD))            # output layer, both decodes
    cost = pl.CostEstimate(
        flops=2 * BPAD * mnk,
        transcendentals=BPAD * (4 * HPAD + 2 * LAT_SEG + 2 * OUTPAD),
        bytes_accessed=weight_bytes + grid[0] * (in_block + out_block),
    )

    outs = pl.pallas_call(
        _make_kernel(compute_dtype),
        out_shape=out_shapes,
        grid_spec=pltpu.PrefetchScalarGridSpec(
            num_scalar_prefetch=0,
            grid=grid,
            in_specs=in_specs,
            out_specs=out_specs,
        ),
        compiler_params=pltpu.CompilerParams(
            dimension_semantics=("parallel",),
            vmem_limit_bytes=vmem_bytes,
        ),
        cost_estimate=cost,
    )(x_p, v_p, eps_a_p, eps_v_p, *weights)

    out_a_p, stats_a, out_v_p, stats_v = outs
    # Mandatory slicing: padded lanes of out_* contain exp(0)=1 and padded
    # rows contain bias-only garbage; never consume the raw padded outputs.
    out_a = out_a_p[:B, :input_dim]
    out_v = out_v_p[:B, :input_dim]
    mu_a = stats_a[:B, :latent_dim]
    logvar_a = stats_a[:B, LAT_SEG:LAT_SEG + latent_dim]
    mu_v = stats_v[:B, :latent_dim]
    logvar_v = stats_v[:B, LAT_SEG:LAT_SEG + latent_dim]

    mupA, sigpA, mupV, sigpV = prepared["priors"]
    return (out_a, mu_a, logvar_a, out_v, mu_v, logvar_v,
            mupA, sigpA, mupV, sigpV)


# ---------------------------------------------------------------------------
# Deterministic parameter init (shapes follow the PyTorch __init__)
# ---------------------------------------------------------------------------
def init_params(key, input_dim, latent_dim, hidden_dim, landmarks_dim, mid_dim=512):
    def linear(k, fan_in, fan_out):
        kw, kb = jax.random.split(k)
        scale = 1.0 / jnp.sqrt(jnp.float32(fan_in))
        w = jax.random.uniform(kw, (fan_in, fan_out), jnp.float32, -scale, scale)
        b = jax.random.uniform(kb, (1, fan_out), jnp.float32, -scale, scale)
        return w, b

    keys = jax.random.split(key, 10)
    p = {}
    p["w_encX"], p["b_encX"] = linear(keys[0], input_dim, hidden_dim)       # encoder_layerX
    p["w_ma"], p["b_ma"] = linear(keys[1], hidden_dim, latent_dim)          # latent_mean_layer_a
    p["w_la"], p["b_la"] = linear(keys[2], hidden_dim, latent_dim)          # latent_logvar_layer_a
    p["w_encV0"], p["b_encV0"] = linear(keys[3], landmarks_dim, mid_dim)    # encoder_layerV0
    p["w_encV"], p["b_encV"] = linear(keys[4], mid_dim, hidden_dim)         # encoder_layerV
    p["w_mv"], p["b_mv"] = linear(keys[5], hidden_dim, latent_dim)          # latent_mean_layer_v
    p["w_lv"], p["b_lv"] = linear(keys[6], hidden_dim, latent_dim)          # latent_logvar_layer_v
    p["w_decZ"], p["b_decZ"] = linear(keys[7], latent_dim, hidden_dim)      # decoder_layerZ
    p["w_decV"], p["b_decV"] = linear(keys[8], mid_dim, hidden_dim)         # decoder_layerV
    p["w_out"], p["b_out"] = linear(keys[9], hidden_dim, input_dim)         # output_layer
    # prior parameters
    p["mupA"] = jnp.zeros((1, latent_dim), jnp.float32)
    p["mupV"] = jnp.zeros((1, latent_dim), jnp.float32)
    p["sigpA"] = jnp.ones((1,), jnp.float32)
    p["sigpV"] = jnp.ones((1,), jnp.float32)
    return p


# ---------------------------------------------------------------------------
# Pure-JAX reference (same math, unfused/unpadded, all f32)
# ---------------------------------------------------------------------------
def reference_forward(x, v, eps_a, eps_v, p):
    he_a = jnp.tanh(x @ p["w_encX"] + p["b_encX"])
    mu_a = he_a @ p["w_ma"] + p["b_ma"]
    logvar_a = he_a @ p["w_la"] + p["b_la"]
    z_a = eps_a * jnp.exp(0.5 * logvar_a) + mu_a

    ve = jax.nn.relu(v @ p["w_encV0"] + p["b_encV0"])
    he_v = jnp.tanh(ve @ p["w_encV"] + p["b_encV"])
    mu_v = he_v @ p["w_mv"] + p["b_mv"]
    logvar_v = he_v @ p["w_lv"] + p["b_lv"]
    z_v = eps_v * jnp.exp(0.5 * logvar_v) + mu_v

    def decode(z):
        hd = jnp.tanh(z @ p["w_decZ"] + p["b_decZ"] + ve @ p["w_decV"] + p["b_decV"])
        return jnp.exp(hd @ p["w_out"] + p["b_out"])

    return decode(z_a), mu_a, logvar_a, decode(z_v), mu_v, logvar_v


if __name__ == "__main__":
    # Small, module-consistent shapes. landmarks_dim is deliberately NOT a
    # multiple of 128 to exercise the padding path (real model: 67*67 = 4489).
    B = 2
    input_dim = 16
    latent_dim = 8
    hidden_dim = 32       # hidden_dim_encoder[0]
    landmarks_dim = 140

    key = jax.random.PRNGKey(0)
    k_params, k_x, k_v, k_ea, k_ev = jax.random.split(key, 5)

    params = init_params(k_params, input_dim, latent_dim, hidden_dim, landmarks_dim)

    x = jax.random.normal(k_x, (B, input_dim), jnp.float32)
    v = jax.random.normal(k_v, (B, landmarks_dim), jnp.float32)
    eps_a = jax.random.normal(k_ea, (B, latent_dim), jnp.float32)
    eps_v = jax.random.normal(k_ev, (B, latent_dim), jnp.float32)

    ref = reference_forward(x, v, eps_a, eps_v, params)

    # Full-f32 path — tight check
    prep_f32 = prepare_weights(params, compute_dtype=jnp.float32)
    outs = jax.block_until_ready(vae_forward(x, v, eps_a, eps_v, prep_f32))
    for got, exp in zip(outs[:6], ref):
        assert got.shape == exp.shape, (got.shape, exp.shape)
        assert jnp.allclose(got, exp, rtol=1e-4, atol=1e-5), "f32 mismatch vs reference"

    # Default path: bf16 storage/MXU for the dominant video matmuls — loose check
    prep_bf16 = prepare_weights(params)   # compute_dtype=jnp.bfloat16 (default)
    outs_bf16 = jax.block_until_ready(vae_forward(x, v, eps_a, eps_v, prep_bf16))
    for got, exp in zip(outs_bf16[:6], ref):
        assert jnp.allclose(got, exp, rtol=7e-2, atol=7e-2), "bf16 mismatch vs reference"

    print("KERNEL_OK")
</pallas_src>

<mosaic_0001>
module attributes {stable_mosaic.version = 11 : i64} {
  func.func @vae_fwd_kernel(%arg0: i32, %arg1: memref<8x16xf32, #tpu.memory_space<vmem>>, %arg2: memref<8x256xf32, #tpu.memory_space<vmem>>, %arg3: memref<8x128xf32, #tpu.memory_space<vmem>>, %arg4: memref<8x128xf32, #tpu.memory_space<vmem>>, %arg5: memref<16x128xf32, #tpu.memory_space<vmem>>, %arg6: memref<1x128xf32, #tpu.memory_space<vmem>>, %arg7: memref<128x256xf32, #tpu.memory_space<vmem>>, %arg8: memref<1x256xf32, #tpu.memory_space<vmem>>, %arg9: memref<256x512xf32, #tpu.memory_space<vmem>>, %arg10: memref<1x512xf32, #tpu.memory_space<vmem>>, %arg11: memref<512x256xf32, #tpu.memory_space<vmem>>, %arg12: memref<1x256xf32, #tpu.memory_space<vmem>>, %arg13: memref<128x256xf32, #tpu.memory_space<vmem>>, %arg14: memref<1x256xf32, #tpu.memory_space<vmem>>, %arg15: memref<128x128xf32, #tpu.memory_space<vmem>>, %arg16: memref<1x128xf32, #tpu.memory_space<vmem>>, %arg17: memref<128x128xf32, #tpu.memory_space<vmem>>, %arg18: memref<1x128xf32, #tpu.memory_space<vmem>>, %arg19: memref<8x128xf32, #tpu.memory_space<vmem>>, %arg20: memref<8x256xf32, #tpu.memory_space<vmem>>, %arg21: memref<8x128xf32, #tpu.memory_space<vmem>>, %arg22: memref<8x256xf32, #tpu.memory_space<vmem>>) attributes {dimension_semantics = [#tpu.dimension_semantics<parallel>], iteration_bounds = array<i64: 1>, scalar_prefetch = 0 : i64, scratch_operands = 0 : i64, tpu.core_type = #tpu.core_type<tc>, window_params = [{transform_indices = @transform_0, window_bounds = array<i64: 8, 16>}, {transform_indices = @transform_1, window_bounds = array<i64: 8, 256>}, {transform_indices = @transform_2, window_bounds = array<i64: 8, 128>}, {transform_indices = @transform_3, window_bounds = array<i64: 8, 128>}, {pipeline_mode = #tpu.pipeline_mode<synchronous>, transform_indices = @transform_4, window_bounds = array<i64: 16, 128>}, {pipeline_mode = #tpu.pipeline_mode<synchronous>, transform_indices = @transform_5, window_bounds = array<i64: 1, 128>}, {pipeline_mode = #tpu.pipeline_mode<synchronous>, transform_indices = @transform_6, window_bounds = array<i64: 128, 256>}, {pipeline_mode = #tpu.pipeline_mode<synchronous>, transform_indices = @transform_7, window_bounds = array<i64: 1, 256>}, {pipeline_mode = #tpu.pipeline_mode<synchronous>, transform_indices = @transform_8, window_bounds = array<i64: 256, 512>}, {pipeline_mode = #tpu.pipeline_mode<synchronous>, transform_indices = @transform_9, window_bounds = array<i64: 1, 512>}, {pipeline_mode = #tpu.pipeline_mode<synchronous>, transform_indices = @transform_10, window_bounds = array<i64: 512, 256>}, {pipeline_mode = #tpu.pipeline_mode<synchronous>, transform_indices = @transform_11, window_bounds = array<i64: 1, 256>}, {pipeline_mode = #tpu.pipeline_mode<synchronous>, transform_indices = @transform_12, window_bounds = array<i64: 128, 256>}, {pipeline_mode = #tpu.pipeline_mode<synchronous>, transform_indices = @transform_13, window_bounds = array<i64: 1, 256>}, {pipeline_mode = #tpu.pipeline_mode<synchronous>, transform_indices = @transform_14, window_bounds = array<i64: 128, 128>}, {pipeline_mode = #tpu.pipeline_mode<synchronous>, transform_indices = @transform_15, window_bounds = array<i64: 1, 128>}, {pipeline_mode = #tpu.pipeline_mode<synchronous>, transform_indices = @transform_16, window_bounds = array<i64: 128, 128>}, {pipeline_mode = #tpu.pipeline_mode<synchronous>, transform_indices = @transform_17, window_bounds = array<i64: 1, 128>}, {transform_indices = @transform_18, window_bounds = array<i64: 8, 128>}, {transform_indices = @transform_19, window_bounds = array<i64: 8, 256>}, {transform_indices = @transform_20, window_bounds = array<i64: 8, 128>}, {transform_indices = @transform_21, window_bounds = array<i64: 8, 256>}]} {
    %c0 = arith.constant 0 : index
    %c0_0 = arith.constant 0 : index
    %0 = vector.load %arg1[%c0, %c0_0] : memref<8x16xf32, #tpu.memory_space<vmem>>, vector<8x16xf32>
    %c0_1 = arith.constant 0 : index
    %c0_2 = arith.constant 0 : index
    %1 = vector.load %arg5[%c0_1, %c0_2] : memref<16x128xf32, #tpu.memory_space<vmem>>, vector<16x128xf32>
    %cst = arith.constant dense<0.000000e+00> : vector<8x128xf32>
    %2 = tpu.matmul %0, %1, %cst {dimension_numbers = #tpu.dot_dimension_numbers<[1], [0], [0], [1], [0, 0, 1, 1], [], []>} : vector<8x16xf32>, vector<16x128xf32>, vector<8x128xf32> -> vector<8x128xf32>
    %c0_3 = arith.constant 0 : index
    %c0_4 = arith.constant 0 : index
    %3 = vector.load %arg6[%c0_3, %c0_4] : memref<1x128xf32, #tpu.memory_space<vmem>>, vector<1x128xf32>
    %4 = vector.broadcast %3 : vector<1x128xf32> to vector<8x128xf32>
    %5 = arith.addf %2, %4 : vector<8x128xf32>
    %6 = math.tanh %5 : vector<8x128xf32>
    %c0_5 = arith.constant 0 : index
    %c0_6 = arith.constant 0 : index
    %7 = vector.load %arg7[%c0_5, %c0_6] : memref<128x256xf32, #tpu.memory_space<vmem>>, vector<128x256xf32>
    %cst_7 = arith.constant dense<0.000000e+00> : vector<8x256xf32>
    %8 = tpu.matmul %6, %7, %cst_7 {dimension_numbers = #tpu.dot_dimension_numbers<[1], [0], [0], [1], [0, 0, 1, 1], [], []>} : vector<8x128xf32>, vector<128x256xf32>, vector<8x256xf32> -> vector<8x256xf32>
    %c0_8 = arith.constant 0 : index
    %c0_9 = arith.constant 0 : index
    %9 = vector.load %arg8[%c0_8, %c0_9] : memref<1x256xf32, #tpu.memory_space<vmem>>, vector<1x256xf32>
    %10 = vector.broadcast %9 : vector<1x256xf32> to vector<8x256xf32>
    %11 = arith.addf %8, %10 : vector<8x256xf32>
    %c0_10 = arith.constant 0 : index
    %c0_11 = arith.constant 0 : index
    %12 = vector.load %arg20[%c0_10, %c0_11] : memref<8x256xf32, #tpu.memory_space<vmem>>, vector<8x256xf32>
    tpu.vector_store %arg20[%c0_10, %c0_11], %11 {strides = array<i32>} : memref<8x256xf32, #tpu.memory_space<vmem>>, vector<8x256xf32>,
    %13 = vector.extract_strided_slice %11 {offsets = [0, 0], sizes = [8, 128], strides = [1, 1]} : vector<8x256xf32> to vector<8x128xf32>
    %c0_12 = arith.constant 0 : index
    %c0_13 = arith.constant 0 : index
    %14 = vector.load %arg3[%c0_12, %c0_13] : memref<8x128xf32, #tpu.memory_space<vmem>>, vector<8x128xf32>
    %15 = vector.extract_strided_slice %11 {offsets = [0, 128], sizes = [8, 128], strides = [1, 1]} : vector<8x256xf32> to vector<8x128xf32>
    %cst_14 = arith.constant 5.000000e-01 : f32
    %16 = vector.broadcast %cst_14 : f32 to vector<8x128xf32>
    %17 = arith.mulf %16, %15 : vector<8x128xf32>
    %18 = math.exp %17 : vector<8x128xf32>
    %19 = arith.mulf %14, %18 : vector<8x128xf32>
    %20 = arith.addf %19, %13 : vector<8x128xf32>
    %c0_15 = arith.constant 0 : index
    %c0_16 = arith.constant 0 : index
    %21 = vector.load %arg2[%c0_15, %c0_16] : memref<8x256xf32, #tpu.memory_space<vmem>>, vector<8x256xf32>
    %c0_17 = arith.constant 0 : index
    %c0_18 = arith.constant 0 : index
    %22 = vector.load %arg9[%c0_17, %c0_18] : memref<256x512xf32, #tpu.memory_space<vmem>>, vector<256x512xf32>
    %cst_19 = arith.constant dense<0.000000e+00> : vector<8x512xf32>
    %23 = tpu.matmul %21, %22, %cst_19 {dimension_numbers = #tpu.dot_dimension_numbers<[1], [0], [0], [1], [0, 0, 1, 1], [], []>} : vector<8x256xf32>, vector<256x512xf32>, vector<8x512xf32> -> vector<8x512xf32>
    %c0_20 = arith.constant 0 : index
    %c0_21 = arith.constant 0 : index
    %24 = vector.load %arg10[%c0_20, %c0_21] : memref<1x512xf32, #tpu.memory_space<vmem>>, vector<1x512xf32>
    %25 = vector.broadcast %24 : vector<1x512xf32> to vector<8x512xf32>
    %26 = arith.addf %23, %25 : vector<8x512xf32>
    %cst_22 = arith.constant 0.000000e+00 : f32
    %27 = vector.broadcast %cst_22 : f32 to vector<8x512xf32>
    %28 = arith.maximumf %26, %27 : vector<8x512xf32>
    %c0_23 = arith.constant 0 : index
    %c0_24 = arith.constant 0 : index
    %29 = vector.load %arg11[%c0_23, %c0_24] : memref<512x256xf32, #tpu.memory_space<vmem>>, vector<512x256xf32>
    %cst_25 = arith.constant dense<0.000000e+00> : vector<8x256xf32>
    %30 = tpu.matmul %28, %29, %cst_25 {dimension_numbers = #tpu.dot_dimension_numbers<[1], [0], [0], [1], [0, 0, 1, 1], [], []>} : vector<8x512xf32>, vector<512x256xf32>, vector<8x256xf32> -> vector<8x256xf32>
    %c0_26 = arith.constant 0 : index
    %c0_27 = arith.constant 0 : index
    %31 = vector.load %arg12[%c0_26, %c0_27] : memref<1x256xf32, #tpu.memory_space<vmem>>, vector<1x256xf32>
    %32 = vector.broadcast %31 : vector<1x256xf32> to vector<8x256xf32>
    %33 = arith.addf %30, %32 : vector<8x256xf32>
    %34 = vector.extract_strided_slice %33 {offsets = [0, 0], sizes = [8, 128], strides = [1, 1]} : vector<8x256xf32> to vector<8x128xf32>
    %35 = math.tanh %34 : vector<8x128xf32>
    %36 = vector.extract_strided_slice %33 {offsets = [0, 128], sizes = [8, 128], strides = [1, 1]} : vector<8x256xf32> to vector<8x128xf32>
    %c0_28 = arith.constant 0 : index
    %c0_29 = arith.constant 0 : index
    %37 = vector.load %arg16[%c0_28, %c0_29] : memref<1x128xf32, #tpu.memory_space<vmem>>, vector<1x128xf32>
    %38 = vector.broadcast %37 : vector<1x128xf32> to vector<8x128xf32>
    %39 = arith.addf %36, %38 : vector<8x128xf32>
    %c0_30 = arith.constant 0 : index
    %c0_31 = arith.constant 0 : index
    %40 = vector.load %arg13[%c0_30, %c0_31] : memref<128x256xf32, #tpu.memory_space<vmem>>, vector<128x256xf32>
    %cst_32 = arith.constant dense<0.000000e+00> : vector<8x256xf32>
    %41 = tpu.matmul %35, %40, %cst_32 {dimension_numbers = #tpu.dot_dimension_numbers<[1], [0], [0], [1], [0, 0, 1, 1], [], []>} : vector<8x128xf32>, vector<128x256xf32>, vector<8x256xf32> -> vector<8x256xf32>
    %c0_33 = arith.constant 0 : index
    %c0_34 = arith.constant 0 : index
    %42 = vector.load %arg14[%c0_33, %c0_34] : memref<1x256xf32, #tpu.memory_space<vmem>>, vector<1x256xf32>
    %43 = vector.broadcast %42 : vector<1x256xf32> to vector<8x256xf32>
    %44 = arith.addf %41, %43 : vector<8x256xf32>
    %c0_35 = arith.constant 0 : index
    %c0_36 = arith.constant 0 : index
    %45 = vector.load %arg22[%c0_35, %c0_36] : memref<8x256xf32, #tpu.memory_space<vmem>>, vector<8x256xf32>
    tpu.vector_store %arg22[%c0_35, %c0_36], %44 {strides = array<i32>} : memref<8x256xf32, #tpu.memory_space<vmem>>, vector<8x256xf32>,
    %46 = vector.extract_strided_slice %44 {offsets = [0, 0], sizes = [8, 128], strides = [1, 1]} : vector<8x256xf32> to vector<8x128xf32>
    %c0_37 = arith.constant 0 : index
    %c0_38 = arith.constant 0 : index
    %47 = vector.load %arg4[%c0_37, %c0_38] : memref<8x128xf32, #tpu.memory_space<vmem>>, vector<8x128xf32>
    %48 = vector.extract_strided_slice %44 {offsets = [0, 128], sizes = [8, 128], strides = [1, 1]} : vector<8x256xf32> to vector<8x128xf32>
    %cst_39 = arith.constant 5.000000e-01 : f32
    %49 = vector.broadcast %cst_39 : f32 to vector<8x128xf32>
    %50 = arith.mulf %49, %48 : vector<8x128xf32>
    %51 = math.exp %50 : vector<8x128xf32>
    %52 = arith.mulf %47, %51 : vector<8x128xf32>
    %53 = arith.addf %52, %46 : vector<8x128xf32>
    %c0_40 = arith.constant 0 : index
    %c0_41 = arith.constant 0 : index
    %54 = vector.load %arg15[%c0_40, %c0_41] : memref<128x128xf32, #tpu.memory_space<vmem>>, vector<128x128xf32>
    %cst_42 = arith.constant dense<0.000000e+00> : vector<8x128xf32>
    %55 = tpu.matmul %20, %54, %cst_42 {dimension_numbers = #tpu.dot_dimension_numbers<[1], [0], [0], [1], [0, 0, 1, 1], [], []>} : vector<8x128xf32>, vector<128x128xf32>, vector<8x128xf32> -> vector<8x128xf32>
    %56 = arith.addf %55, %39 : vector<8x128xf32>
    %57 = math.tanh %56 : vector<8x128xf32>
    %c0_43 = arith.constant 0 : index
    %c0_44 = arith.constant 0 : index
    %58 = vector.load %arg17[%c0_43, %c0_44] : memref<128x128xf32, #tpu.memory_space<vmem>>, vector<128x128xf32>
    %cst_45 = arith.constant dense<0.000000e+00> : vector<8x128xf32>
    %59 = tpu.matmul %57, %58, %cst_45 {dimension_numbers = #tpu.dot_dimension_numbers<[1], [0], [0], [1], [0, 0, 1, 1], [], []>} : vector<8x128xf32>, vector<128x128xf32>, vector<8x128xf32> -> vector<8x128xf32>
    %c0_46 = arith.constant 0 : index
    %c0_47 = arith.constant 0 : index
    %60 = vector.load %arg18[%c0_46, %c0_47] : memref<1x128xf32, #tpu.memory_space<vmem>>, vector<1x128xf32>
    %61 = vector.broadcast %60 : vector<1x128xf32> to vector<8x128xf32>
    %62 = arith.addf %59, %61 : vector<8x128xf32>
    %63 = math.exp %62 : vector<8x128xf32>
    %c0_48 = arith.constant 0 : index
    %c0_49 = arith.constant 0 : index
    %64 = vector.load %arg19[%c0_48, %c0_49] : memref<8x128xf32, #tpu.memory_space<vmem>>, vector<8x128xf32>
    tpu.vector_store %arg19[%c0_48, %c0_49], %63 {strides = array<i32>} : memref<8x128xf32, #tpu.memory_space<vmem>>, vector<8x128xf32>,
    %c0_50 = arith.constant 0 : index
    %c0_51 = arith.constant 0 : index
    %65 = vector.load %arg15[%c0_50, %c0_51] : memref<128x128xf32, #tpu.memory_space<vmem>>, vector<128x128xf32>
    %cst_52 = arith.constant dense<0.000000e+00> : vector<8x128xf32>
    %66 = tpu.matmul %53, %65, %cst_52 {dimension_numbers = #tpu.dot_dimension_numbers<[1], [0], [0], [1], [0, 0, 1, 1], [], []>} : vector<8x128xf32>, vector<128x128xf32>, vector<8x128xf32> -> vector<8x128xf32>
    %67 = arith.addf %66, %39 : vector<8x128xf32>
    %68 = math.tanh %67 : vector<8x128xf32>
    %c0_53 = arith.constant 0 : index
    %c0_54 = arith.constant 0 : index
    %69 = vector.load %arg17[%c0_53, %c0_54] : memref<128x128xf32, #tpu.memory_space<vmem>>, vector<128x128xf32>
    %cst_55 = arith.constant dense<0.000000e+00> : vector<8x128xf32>
    %70 = tpu.matmul %68, %69, %cst_55 {dimension_numbers = #tpu.dot_dimension_numbers<[1], [0], [0], [1], [0, 0, 1, 1], [], []>} : vector<8x128xf32>, vector<128x128xf32>, vector<8x128xf32> -> vector<8x128xf32>
    %c0_56 = arith.constant 0 : index
    %c0_57 = arith.constant 0 : index
    %71 = vector.load %arg18[%c0_56, %c0_57] : memref<1x128xf32, #tpu.memory_space<vmem>>, vector<1x128xf32>
    %72 = vector.broadcast %71 : vector<1x128xf32> to vector<8x128xf32>
    %73 = arith.addf %70, %72 : vector<8x128xf32>
    %74 = math.exp %73 : vector<8x128xf32>
    %c0_58 = arith.constant 0 : index
    %c0_59 = arith.constant 0 : index
    %75 = vector.load %arg21[%c0_58, %c0_59] : memref<8x128xf32, #tpu.memory_space<vmem>>, vector<8x128xf32>
    tpu.vector_store %arg21[%c0_58, %c0_59], %74 {strides = array<i32>} : memref<8x128xf32, #tpu.memory_space<vmem>>, vector<8x128xf32>,
    return
  }
  func.func @transform_0(%arg0: i32) -> (i32, i32) {
    %c0_i32 = arith.constant 0 : i32
    %c0_i32_0 = arith.constant 0 : i32
    return %arg0, %c0_i32 : i32, i32
  }
  func.func @transform_1(%arg0: i32) -> (i32, i32) {
    %c0_i32 = arith.constant 0 : i32
    %c0_i32_0 = arith.constant 0 : i32
    return %arg0, %c0_i32 : i32, i32
  }
  func.func @transform_2(%arg0: i32) -> (i32, i32) {
    %c0_i32 = arith.constant 0 : i32
    %c0_i32_0 = arith.constant 0 : i32
    return %arg0, %c0_i32 : i32, i32
  }
  func.func @transform_3(%arg0: i32) -> (i32, i32) {
    %c0_i32 = arith.constant 0 : i32
    %c0_i32_0 = arith.constant 0 : i32
    return %arg0, %c0_i32 : i32, i32
  }
  func.func @transform_4(%arg0: i32) -> (i32, i32) {
    %c0_i32 = arith.constant 0 : i32
    %c0_i32_0 = arith.constant 0 : i32
    %c0_i32_1 = arith.constant 0 : i32
    return %c0_i32, %c0_i32_0 : i32, i32
  }
  func.func @transform_5(%arg0: i32) -> (i32, i32) {
    %c0_i32 = arith.constant 0 : i32
    %c0_i32_0 = arith.constant 0 : i32
    %c0_i32_1 = arith.constant 0 : i32
    return %c0_i32, %c0_i32_0 : i32, i32
  }
  func.func @transform_6(%arg0: i32) -> (i32, i32) {
    %c0_i32 = arith.constant 0 : i32
    %c0_i32_0 = arith.constant 0 : i32
    %c0_i32_1 = arith.constant 0 : i32
    return %c0_i32, %c0_i32_0 : i32, i32
  }
  func.func @transform_7(%arg0: i32) -> (i32, i32) {
    %c0_i32 = arith.constant 0 : i32
    %c0_i32_0 = arith.constant 0 : i32
    %c0_i32_1 = arith.constant 0 : i32
    return %c0_i32, %c0_i32_0 : i32, i32
  }
  func.func @transform_8(%arg0: i32) -> (i32, i32) {
    %c0_i32 = arith.constant 0 : i32
    %c0_i32_0 = arith.constant 0 : i32
    %c0_i32_1 = arith.constant 0 : i32
    return %c0_i32, %c0_i32_0 : i32, i32
  }
  func.func @transform_9(%arg0: i32) -> (i32, i32) {
    %c0_i32 = arith.constant 0 : i32
    %c0_i32_0 = arith.constant 0 : i32
    %c0_i32_1 = arith.constant 0 : i32
    return %c0_i32, %c0_i32_0 : i32, i32
  }
  func.func @transform_10(%arg0: i32) -> (i32, i32) {
    %c0_i32 = arith.constant 0 : i32
    %c0_i32_0 = arith.constant 0 : i32
    %c0_i32_1 = arith.constant 0 : i32
    return %c0_i32, %c0_i32_0 : i32, i32
  }
  func.func @transform_11(%arg0: i32) -> (i32, i32) {
    %c0_i32 = arith.constant 0 : i32
    %c0_i32_0 = arith.constant 0 : i32
    %c0_i32_1 = arith.constant 0 : i32
    return %c0_i32, %c0_i32_0 : i32, i32
  }
  func.func @transform_12(%arg0: i32) -> (i32, i32) {
    %c0_i32 = arith.constant 0 : i32
    %c0_i32_0 = arith.constant 0 : i32
    %c0_i32_1 = arith.constant 0 : i32
    return %c0_i32, %c0_i32_0 : i32, i32
  }
  func.func @transform_13(%arg0: i32) -> (i32, i32) {
    %c0_i32 = arith.constant 0 : i32
    %c0_i32_0 = arith.constant 0 : i32
    %c0_i32_1 = arith.constant 0 : i32
    return %c0_i32, %c0_i32_0 : i32, i32
  }
  func.func @transform_14(%arg0: i32) -> (i32, i32) {
    %c0_i32 = arith.constant 0 : i32
    %c0_i32_0 = arith.constant 0 : i32
    %c0_i32_1 = arith.constant 0 : i32
    return %c0_i32, %c0_i32_0 : i32, i32
  }
  func.func @transform_15(%arg0: i32) -> (i32, i32) {
    %c0_i32 = arith.constant 0 : i32
    %c0_i32_0 = arith.constant 0 : i32
    %c0_i32_1 = arith.constant 0 : i32
    return %c0_i32, %c0_i32_0 : i32, i32
  }
  func.func @transform_16(%arg0: i32) -> (i32, i32) {
    %c0_i32 = arith.constant 0 : i32
    %c0_i32_0 = arith.constant 0 : i32
    %c0_i32_1 = arith.constant 0 : i32
    return %c0_i32, %c0_i32_0 : i32, i32
  }
  func.func @transform_17(%arg0: i32) -> (i32, i32) {
    %c0_i32 = arith.constant 0 : i32
    %c0_i32_0 = arith.constant 0 : i32
    %c0_i32_1 = arith.constant 0 : i32
    return %c0_i32, %c0_i32_0 : i32, i32
  }
  func.func @transform_18(%arg0: i32) -> (i32, i32) {
    %c0_i32 = arith.constant 0 : i32
    %c0_i32_0 = arith.constant 0 : i32
    return %arg0, %c0_i32 : i32, i32
  }
  func.func @transform_19(%arg0: i32) -> (i32, i32) {
    %c0_i32 = arith.constant 0 : i32
    %c0_i32_0 = arith.constant 0 : i32
    return %arg0, %c0_i32 : i32, i32
  }
  func.func @transform_20(%arg0: i32) -> (i32, i32) {
    %c0_i32 = arith.constant 0 : i32
    %c0_i32_0 = arith.constant 0 : i32
    return %arg0, %c0_i32 : i32, i32
  }
  func.func @transform_21(%arg0: i32) -> (i32, i32) {
    %c0_i32 = arith.constant 0 : i32
    %c0_i32_0 = arith.constant 0 : i32
    return %arg0, %c0_i32 : i32, i32
  }
}

</mosaic_0001>

<llo_original>
// kernel: tpu_custom_call.1
$region0: #{tpu_custom_call.1}
  #allocation0 [shape = 'u32[]', space=smem, size = 0x4, offset = 0x4, fixed_abs, tag = 'smem constant byte address 0x4 - core index']
  #allocation1 [shape = 'u32[72,128]{1,0:T(1,128)}', space=vmem, size = 0x9000, scoped, tag = 'internal scratch']
  %s0 = inlined_call_operand.hbm [shape: f32[8,16], index: 0, kind: input, shape index: {}]
  %s1 = inlined_call_operand.hbm [shape: f32[8,256], index: 1, kind: input, shape index: {}]
  %s2 = inlined_call_operand.hbm [shape: f32[8,128], index: 2, kind: input, shape index: {}]
  %s3 = inlined_call_operand.hbm [shape: f32[8,128], index: 3, kind: input, shape index: {}]
  %s4 = inlined_call_operand.hbm [shape: f32[16,128], index: 4, kind: input, shape index: {}]
  %s5 = inlined_call_operand.hbm [shape: f32[1,128], index: 5, kind: input, shape index: {}]
  %s6 = inlined_call_operand.hbm [shape: f32[128,256], index: 6, kind: input, shape index: {}]
  %s7 = inlined_call_operand.vmem [shape: f32[1,256], index: 7, kind: input, shape index: {}]
  %s8 = inlined_call_operand.hbm [shape: f32[256,512], index: 8, kind: input, shape index: {}]
  %s9 = inlined_call_operand.vmem [shape: f32[1,512], index: 9, kind: input, shape index: {}]
  %s10 = inlined_call_operand.hbm [shape: f32[512,256], index: 10, kind: input, shape index: {}]
  %s11 = inlined_call_operand.vmem [shape: f32[1,256], index: 11, kind: input, shape index: {}]
  %s12 = inlined_call_operand.hbm [shape: f32[128,256], index: 12, kind: input, shape index: {}]
  %s13 = inlined_call_operand.vmem [shape: f32[1,256], index: 13, kind: input, shape index: {}]
  %s14 = inlined_call_operand.hbm [shape: f32[128,128], index: 14, kind: input, shape index: {}]
  %s15 = inlined_call_operand.vmem [shape: f32[1,128], index: 15, kind: input, shape index: {}]
  %s16 = inlined_call_operand.hbm [shape: f32[128,128], index: 16, kind: input, shape index: {}]
  %s17 = inlined_call_operand.vmem [shape: f32[1,128], index: 17, kind: input, shape index: {}]
  %s18 = inlined_call_operand.hbm [shape: f32[8,128], index: 18, kind: output, shape index: {0}]
  %s19 = inlined_call_operand.hbm [shape: f32[8,256], index: 19, kind: output, shape index: {1}]
  %s20 = inlined_call_operand.hbm [shape: f32[8,128], index: 20, kind: output, shape index: {2}]
  %s21 = inlined_call_operand.hbm [shape: f32[8,256], index: 21, kind: output, shape index: {3}]
  %22 = xla_tuple %s18, %s19, %s20, %s21
  %s23 = sld [smem:[#allocation0]]
  $region154: #{tpu_custom_call.1} parent=0
    _
  %s25 = ssub.s32 1, %s23
  %s26 = scalar_select 0, %s25, %s23
  $region1: #{tpu_custom_call.1} parent=0
    #allocation2 [shape = 'u8[4096]{0}', space=vmem, size = 0x1000, scoped, tag = 'input window, operand 0, single buffered']
    #allocation3 [shape = 's32[1]{0}', space=sflag, size = 0x4, scoped, tag = 'scoped memory for tpu_custom_call.1']
    #allocation4 [shape = 's32[1]{0}', space=sflag, size = 0x4, scoped, tag = 'scoped memory for tpu_custom_call.1']
    #allocation5 [shape = 'u8[8192]{0}', space=vmem, size = 0x2000, scoped, tag = 'input window, operand 1, single buffered']
    #allocation6 [shape = 's32[1]{0}', space=sflag, size = 0x4, scoped, tag = 'scoped memory for tpu_custom_call.1']
    #allocation7 [shape = 'u8[4096]{0}', space=vmem, size = 0x1000, scoped, tag = 'input window, operand 2, single buffered']
    #allocation8 [shape = 'u8[4096]{0}', space=vmem, size = 0x1000, scoped, tag = 'input window, operand 3, single buffered']
    #allocation9 [shape = 's32[1]{0}', space=sflag, size = 0x4, scoped, tag = 'scoped memory for tpu_custom_call.1']
    #allocation10 [shape = 'u8[8192]{0}', space=vmem, size = 0x2000, scoped, tag = 'input window, operand 4, single buffered']
    #allocation11 [shape = 'u8[512]{0}', space=vmem, size = 0x400, scoped, tag = 'input window, operand 5, single buffered']
    #allocation12 [shape = 's32[1]{0}', space=sflag, size = 0x4, scoped, tag = 'scoped memory for tpu_custom_call.1']
    #allocation13 [shape = 'u8[131072]{0}', space=vmem, size = 0x20000, scoped, tag = 'input window, operand 6, single buffered']
    #allocation14 [shape = 'u8[524288]{0}', space=vmem, size = 0x80000, scoped, tag = 'input window, operand 8, single buffered']
    #allocation15 [shape = 's32[1]{0}', space=sflag, size = 0x4, scoped, tag = 'scoped memory for tpu_custom_call.1']
    #allocation16 [shape = 'u8[524288]{0}', space=vmem, size = 0x80000, scoped, tag = 'input window, operand 10, single buffered']
    #allocation17 [shape = 'u8[131072]{0}', space=vmem, size = 0x20000, scoped, tag = 'input window, operand 12, single buffered']
    #allocation18 [shape = 's32[1]{0}', space=sflag, size = 0x4, scoped, tag = 'scoped memory for tpu_custom_call.1']
    #allocation19 [shape = 'u8[65536]{0}', space=vmem, size = 0x10000, scoped, tag = 'input window, operand 14, single buffered']
    #allocation20 [shape = 'u8[65536]{0}', space=vmem, size = 0x10000, scoped, tag = 'input window, operand 16, single buffered']
    #allocation21 [shape = 's32[1]{0}', space=sflag, size = 0x4, scoped, tag = 'scoped memory for tpu_custom_call.1']
    #allocation22 [shape = 'u8[4096]{0}', space=vmem, size = 0x1000, scoped, tag = 'output window, operand 0, single buffered']
    #allocation23 [shape = 'u8[8192]{0}', space=vmem, size = 0x2000, scoped, tag = 'output window, operand 1, single buffered']
    #allocation24 [shape = 's32[1]{0}', space=sflag, size = 0x4, scoped, tag = 'scoped memory for tpu_custom_call.1']
    #allocation25 [shape = 'u8[4096]{0}', space=vmem, size = 0x1000, scoped, tag = 'output window, operand 2, single buffered']
    #allocation26 [shape = 'u8[8192]{0}', space=vmem, size = 0x2000, scoped, tag = 'output window, operand 3, single buffered']
    #allocation27 [shape = 's32[1]{0}', space=sflag, size = 0x4, scoped, tag = 'scoped memory for tpu_custom_call.1']
    %27 = vsyncpa [#allocation3], 0
    %28 = vsyncpa [#allocation6], 0
    %29 = vsyncpa [#allocation9], 0
    %30 = vsyncpa [#allocation12], 0
    %31 = vsyncpa [#allocation15], 0
    %32 = vsyncpa [#allocation18], 0
    %33 = vsyncpa [#allocation21], 0
    %34 = vsyncpa [#allocation4], 0
    %35 = vsyncpa [#allocation24], 0
    %36 = vsyncpa [#allocation27], 0
    // Predicated region
    $region2: #{tpu_custom_call.1} parent=1 // pred_check
      _
    $region3: #{tpu_custom_call.1} parent=1 // pred_check_branch
      %38 = sbr.rel (0) target = $region5
    $region4: #{tpu_custom_call.1} parent=1 // pred_region
      %40 = vsyncadd [#allocation3], 0
      %s42 = sshll.u32 %s0, 4
      %s43 = int_to_ptr.hbm [resolvable:$true] %s42
      %s44 = sshll.u32 [#allocation2], 4
      %s45 = int_to_ptr.vmem [resolvable:$true] %s44
      %47 = dma.hbm_to_vmem [thread:$0]  %s43, 128, %s45, [#allocation3]
    $region5: #{tpu_custom_call.1} parent=1 // pred_fallthru
      _
    // Predicated region
    $region6: #{tpu_custom_call.1} parent=1 // pred_check
      _
    $region7: #{tpu_custom_call.1} parent=1 // pred_check_branch
      %49 = sbr.rel (0) target = $region9
    $region8: #{tpu_custom_call.1} parent=1 // pred_region
      %51 = vsyncadd [#allocation6], 0
      %s53 = sshll.u32 %s1, 4
      %s54 = int_to_ptr.hbm [resolvable:$true] %s53
      %s55 = sshll.u32 [#allocation5], 4
      %s56 = int_to_ptr.vmem [resolvable:$true] %s55
      %58 = dma.hbm_to_vmem [thread:$0]  %s54, 256, %s56, [#allocation6]
    $region9: #{tpu_custom_call.1} parent=1 // pred_fallthru
      _
    // Predicated region
    $region10: #{tpu_custom_call.1} parent=1 // pred_check
      _
    $region11: #{tpu_custom_call.1} parent=1 // pred_check_branch
      %60 = sbr.rel (0) target = $region13
    $region12: #{tpu_custom_call.1} parent=1 // pred_region
      %62 = vsyncadd [#allocation6], 0
      %s64 = sshll.u32 %s2, 4
      %s65 = int_to_ptr.hbm [resolvable:$true] %s64
      %s66 = sshll.u32 [#allocation7], 4
      %s67 = int_to_ptr.vmem [resolvable:$true] %s66
      %69 = dma.hbm_to_vmem [thread:$0]  %s65, 128, %s67, [#allocation6]
    $region13: #{tpu_custom_call.1} parent=1 // pred_fallthru
      _
    // Predicated region
    $region14: #{tpu_custom_call.1} parent=1 // pred_check
      _
    $region15: #{tpu_custom_call.1} parent=1 // pred_check_branch
      %71 = sbr.rel (0) target = $region17
    $region16: #{tpu_custom_call.1} parent=1 // pred_region
      %73 = vsyncadd [#allocation9], 0
      %s75 = sshll.u32 %s3, 4
      %s76 = int_to_ptr.hbm [resolvable:$true] %s75
      %s77 = sshll.u32 [#allocation8], 4
      %s78 = int_to_ptr.vmem [resolvable:$true] %s77
      %80 = dma.hbm_to_vmem [thread:$0]  %s76, 128, %s78, [#allocation9]
    $region17: #{tpu_custom_call.1} parent=1 // pred_fallthru
      _
    // Predicated region
    $region18: #{tpu_custom_call.1} parent=1 // pred_check
      _
    $region19: #{tpu_custom_call.1} parent=1 // pred_check_branch
      %82 = sbr.rel (0) target = $region21
    $region20: #{tpu_custom_call.1} parent=1 // pred_region
      %84 = vsyncadd [#allocation9], 0
      %s85 = sshll.u32 %s4, 4
      %s86 = int_to_ptr.hbm [resolvable:$true] %s85
      %s87 = sshll.u32 [#allocation10], 4
      %s88 = int_to_ptr.vmem [resolvable:$true] %s87
      %93 = dma.hbm_to_vmem [thread:$0]  %s86, 256, %s88, [#allocation9], 128, 128, 8
    $region21: #{tpu_custom_call.1} parent=1 // pred_fallthru
      _
    // Predicated region
    $region22: #{tpu_custom_call.1} parent=1 // pred_check
      _
    $region23: #{tpu_custom_call.1} parent=1 // pred_check_branch
      %95 = sbr.rel (0) target = $region25
    $region24: #{tpu_custom_call.1} parent=1 // pred_region
      %97 = vsyncadd [#allocation12], 0
      %s99 = sshll.u32 %s5, 4
      %s100 = int_to_ptr.hbm [resolvable:$true] %s99
      %s101 = sshll.u32 [#allocation11], 4
      %s102 = int_to_ptr.vmem [resolvable:$true] %s101
      %104 = dma.hbm_to_vmem [thread:$0]  %s100, 16, %s102, [#allocation12]
    $region25: #{tpu_custom_call.1} parent=1 // pred_fallthru
      _
    // Predicated region
    $region26: #{tpu_custom_call.1} parent=1 // pred_check
      _
    $region27: #{tpu_custom_call.1} parent=1 // pred_check_branch
      %106 = sbr.rel (0) target = $region29
    $region28: #{tpu_custom_call.1} parent=1 // pred_region
      %108 = vsyncadd [#allocation12], 0
      %s109 = sshll.u32 %s6, 4
      %s110 = int_to_ptr.hbm [resolvable:$true] %s109
      %s111 = sshll.u32 [#allocation13], 4
      %s112 = int_to_ptr.vmem [resolvable:$true] %s111
      %117 = dma.hbm_to_vmem [thread:$0]  %s110, 4096, %s112, [#allocation12], 256, 256, 16
    $region29: #{tpu_custom_call.1} parent=1 // pred_fallthru
      _
    // Predicated region
    $region30: #{tpu_custom_call.1} parent=1 // pred_check
      _
    $region31: #{tpu_custom_call.1} parent=1 // pred_check_branch
      %119 = sbr.rel (0) target = $region33
    $region32: #{tpu_custom_call.1} parent=1 // pred_region
      _
    $region33: #{tpu_custom_call.1} parent=1 // pred_fallthru
      _
    // Predicated region
    $region34: #{tpu_custom_call.1} parent=1 // pred_check
      _
    $region35: #{tpu_custom_call.1} parent=1 // pred_check_branch
      %121 = sbr.rel (0) target = $region37
    $region36: #{tpu_custom_call.1} parent=1 // pred_region
      %123 = vsyncadd [#allocation15], 0
      %s124 = sshll.u32 %s8, 4
      %s125 = int_to_ptr.hbm [resolvable:$true] %s124
      %s126 = sshll.u32 [#allocation14], 4
      %s127 = int_to_ptr.vmem [resolvable:$true] %s126
      %132 = dma.hbm_to_vmem [thread:$0]  %s125, 16384, %s127, [#allocation15], 512, 512, 32
    $region37: #{tpu_custom_call.1} parent=1 // pred_fallthru
      _
    // Predicated region
    $region38: #{tpu_custom_call.1} parent=1 // pred_check
      _
    $region39: #{tpu_custom_call.1} parent=1 // pred_check_branch
      %134 = sbr.rel (0) target = $region41
    $region40: #{tpu_custom_call.1} parent=1 // pred_region
      _
    $region41: #{tpu_custom_call.1} parent=1 // pred_fallthru
      _
    // Predicated region
    $region42: #{tpu_custom_call.1} parent=1 // pred_check
      _
    $region43: #{tpu_custom_call.1} parent=1 // pred_check_branch
      %136 = sbr.rel (0) target = $region45
    $region44: #{tpu_custom_call.1} parent=1 // pred_region
      %138 = vsyncadd [#allocation15], 0
      %s139 = sshll.u32 %s10, 4
      %s140 = int_to_ptr.hbm [resolvable:$true] %s139
      %s141 = sshll.u32 [#allocation16], 4
      %s142 = int_to_ptr.vmem [resolvable:$true] %s141
      %147 = dma.hbm_to_vmem [thread:$0]  %s140, 16384, %s142, [#allocation15], 256, 256, 16
    $region45: #{tpu_custom_call.1} parent=1 // pred_fallthru
      _
    // Predicated region
    $region46: #{tpu_custom_call.1} parent=1 // pred_check
      _
    $region47: #{tpu_custom_call.1} parent=1 // pred_check_branch
      %149 = sbr.rel (0) target = $region49
    $region48: #{tpu_custom_call.1} parent=1 // pred_region
      _
    $region49: #{tpu_custom_call.1} parent=1 // pred_fallthru
      _
    // Predicated region
    $region50: #{tpu_custom_call.1} parent=1 // pred_check
      _
    $region51: #{tpu_custom_call.1} parent=1 // pred_check_branch
      %151 = sbr.rel (0) target = $region53
    $region52: #{tpu_custom_call.1} parent=1 // pred_region
      %153 = vsyncadd [#allocation18], 0
      %s154 = sshll.u32 %s12, 4
      %s155 = int_to_ptr.hbm [resolvable:$true] %s154
      %s156 = sshll.u32 [#allocation17], 4
      %s157 = int_to_ptr.vmem [resolvable:$true] %s156
      %162 = dma.hbm_to_vmem [thread:$0]  %s155, 4096, %s157, [#allocation18], 256, 256, 16
    $region53: #{tpu_custom_call.1} parent=1 // pred_fallthru
      _
    // Predicated region
    $region54: #{tpu_custom_call.1} parent=1 // pred_check
      _
    $region55: #{tpu_custom_call.1} parent=1 // pred_check_branch
      %164 = sbr.rel (0) target = $region57
    $region56: #{tpu_custom_call.1} parent=1 // pred_region
      _
    $region57: #{tpu_custom_call.1} parent=1 // pred_fallthru
      _
    // Predicated region
    $region58: #{tpu_custom_call.1} parent=1 // pred_check
      _
    $region59: #{tpu_custom_call.1} parent=1 // pred_check_branch
      %166 = sbr.rel (0) target = $region61
    $region60: #{tpu_custom_call.1} parent=1 // pred_region
      %168 = vsyncadd [#allocation18], 0
      %s169 = sshll.u32 %s14, 4
      %s170 = int_to_ptr.hbm [resolvable:$true] %s169
      %s171 = sshll.u32 [#allocation19], 4
      %s172 = int_to_ptr.vmem [resolvable:$true] %s171
      %177 = dma.hbm_to_vmem [thread:$0]  %s170, 2048, %s172, [#allocation18], 128, 128, 8
    $region61: #{tpu_custom_call.1} parent=1 // pred_fallthru
      _
    // Predicated region
    $region62: #{tpu_custom_call.1} parent=1 // pred_check
      _
    $region63: #{tpu_custom_call.1} parent=1 // pred_check_branch
      %179 = sbr.rel (0) target = $region65
    $region64: #{tpu_custom_call.1} parent=1 // pred_region
      _
    $region65: #{tpu_custom_call.1} parent=1 // pred_fallthru
      _
    // Predicated region
    $region66: #{tpu_custom_call.1} parent=1 // pred_check
      _
    $region67: #{tpu_custom_call.1} parent=1 // pred_check_branch
      %181 = sbr.rel (0) target = $region69
    $region68: #{tpu_custom_call.1} parent=1 // pred_region
      %183 = vsyncadd [#allocation21], 0
      %s184 = sshll.u32 %s16, 4
      %s185 = int_to_ptr.hbm [resolvable:$true] %s184
      %s186 = sshll.u32 [#allocation20], 4
      %s187 = int_to_ptr.vmem [resolvable:$true] %s186
      %192 = dma.hbm_to_vmem [thread:$0]  %s185, 2048, %s187, [#allocation21], 128, 128, 8
    $region69: #{tpu_custom_call.1} parent=1 // pred_fallthru
      _
    // Predicated region
    $region70: #{tpu_custom_call.1} parent=1 // pred_check
      _
    $region71: #{tpu_custom_call.1} parent=1 // pred_check_branch
      %194 = sbr.rel (0) target = $region73
    $region72: #{tpu_custom_call.1} parent=1 // pred_region
      _
    $region73: #{tpu_custom_call.1} parent=1 // pred_fallthru
      _
    // Predicated region
    $region74: #{tpu_custom_call.1} parent=1 // pred_check
      _
    $region75: #{tpu_custom_call.1} parent=1 // pred_check_branch
      %196 = sbr.rel (0) target = $region77
    $region76: #{tpu_custom_call.1} parent=1 // pred_region
      %198 = dma.done [#allocation3], 128
    $region77: #{tpu_custom_call.1} parent=1 // pred_fallthru
      _
    // Predicated region
    $region78: #{tpu_custom_call.1} parent=1 // pred_check
      _
    $region79: #{tpu_custom_call.1} parent=1 // pred_check_branch
      %200 = sbr.rel (0) target = $region81
    $region80: #{tpu_custom_call.1} parent=1 // pred_region
      %202 = dma.done [#allocation6], 256
    $region81: #{tpu_custom_call.1} parent=1 // pred_fallthru
      _
    // Predicated region
    $region82: #{tpu_custom_call.1} parent=1 // pred_check
      _
    $region83: #{tpu_custom_call.1} parent=1 // pred_check_branch
      %204 = sbr.rel (0) target = $region85
    $region84: #{tpu_custom_call.1} parent=1 // pred_region
      %206 = dma.done [#allocation6], 128
    $region85: #{tpu_custom_call.1} parent=1 // pred_fallthru
      _
    // Predicated region
    $region86: #{tpu_custom_call.1} parent=1 // pred_check
      _
    $region87: #{tpu_custom_call.1} parent=1 // pred_check_branch
      %208 = sbr.rel (0) target = $region89
    $region88: #{tpu_custom_call.1} parent=1 // pred_region
      %210 = dma.done [#allocation9], 128
    $region89: #{tpu_custom_call.1} parent=1 // pred_fallthru
      _
    // Predicated region
    $region90: #{tpu_custom_call.1} parent=1 // pred_check
      _
    $region91: #{tpu_custom_call.1} parent=1 // pred_check_branch
      %212 = sbr.rel (0) target = $region93
    $region92: #{tpu_custom_call.1} parent=1 // pred_region
      %214 = dma.done [#allocation9], 256
    $region93: #{tpu_custom_call.1} parent=1 // pred_fallthru
      _
    // Predicated region
    $region94: #{tpu_custom_call.1} parent=1 // pred_check
      _
    $region95: #{tpu_custom_call.1} parent=1 // pred_check_branch
      %216 = sbr.rel (0) target = $region97
    $region96: #{tpu_custom_call.1} parent=1 // pred_region
      %218 = dma.done [#allocation12], 16
    $region97: #{tpu_custom_call.1} parent=1 // pred_fallthru
      _
    // Predicated region
    $region98: #{tpu_custom_call.1} parent=1 // pred_check
      _
    $region99: #{tpu_custom_call.1} parent=1 // pred_check_branch
      %220 = sbr.rel (0) target = $region101
    $region100: #{tpu_custom_call.1} parent=1 // pred_region
      %222 = dma.done [#allocation12], 4096
    $region101: #{tpu_custom_call.1} parent=1 // pred_fallthru
      _
    // Predicated region
    $region102: #{tpu_custom_call.1} parent=1 // pred_check
      _
    $region103: #{tpu_custom_call.1} parent=1 // pred_check_branch
      %224 = sbr.rel (0) target = $region105
    $region104: #{tpu_custom_call.1} parent=1 // pred_region
      %226 = dma.done [#allocation15], 16384
    $region105: #{tpu_custom_call.1} parent=1 // pred_fallthru
      _
    // Predicated region
    $region106: #{tpu_custom_call.1} parent=1 // pred_check
      _
    $region107: #{tpu_custom_call.1} parent=1 // pred_check_branch
      %228 = sbr.rel (0) target = $region109
    $region108: #{tpu_custom_call.1} parent=1 // pred_region
      %230 = dma.done [#allocation15], 16384
    $region109: #{tpu_custom_call.1} parent=1 // pred_fallthru
      _
    // Predicated region
    $region110: #{tpu_custom_call.1} parent=1 // pred_check
      _
    $region111: #{tpu_custom_call.1} parent=1 // pred_check_branch
      %232 = sbr.rel (0) target = $region113
    $region112: #{tpu_custom_call.1} parent=1 // pred_region
      %234 = dma.done [#allocation18], 4096
    $region113: #{tpu_custom_call.1} parent=1 // pred_fallthru
      _
    // Predicated region
    $region114: #{tpu_custom_call.1} parent=1 // pred_check
      _
    $region115: #{tpu_custom_call.1} parent=1 // pred_check_branch
      %236 = sbr.rel (0) target = $region117
    $region116: #{tpu_custom_call.1} parent=1 // pred_region
      %238 = dma.done [#allocation18], 2048
    $region117: #{tpu_custom_call.1} parent=1 // pred_fallthru
      _
    // Predicated region
    $region118: #{tpu_custom_call.1} parent=1 // pred_check
      _
    $region119: #{tpu_custom_call.1} parent=1 // pred_check_branch
      %240 = sbr.rel (0) target = $region121
    $region120: #{tpu_custom_call.1} parent=1 // pred_region
      %242 = dma.done [#allocation21], 2048
    $region121: #{tpu_custom_call.1} parent=1 // pred_fallthru
      _
    %v243 = vld [vmem:[#allocation2] sm:$0xff]
    %v244 = vld [vmem:[#allocation10] sm:$0xff]
    %v245 = vld [vmem:[#allocation10 + $0x8] sm:$0xff]
    %v246 = vld [vmem:[#allocation11] sm:$0x1]
    %v248 = vperm.slane %v246, 0
    %vm250 = vcmask 130048
    %v252 = vsel %vm250, %v243, 0
    %254 = vmatpush.msra.mxu0 0.0
    %255 = vmatpush.msra.mxu0 0.0
    %256 = vmatpush.msra.mxu0 0.0
    %257 = vmatpush.msra.mxu0 0.0
    %258 = vmatpush.msra.mxu0 0.0
    %259 = vmatpush.msra.mxu0 0.0
    %260 = vmatpush.msra.mxu0 0.0
    %261 = vmatpush.msra.mxu0 0.0
    %262 = vmatpush.msra.mxu0 0.0
    %263 = vmatpush.msra.mxu0 0.0
    %264 = vmatpush.msra.mxu0 0.0
    %265 = vmatpush.msra.mxu0 0.0
    %266 = vmatpush.msra.mxu0 0.0
    %267 = vmatpush.msra.mxu0 0.0
    %268 = vmatpush.msra.mxu0 %v245
    %269 = vmatpush.msra.mxu0 %v244
    %270 = vmatmul.f32.gmra.mxu0 %v252
    %v271 = vpop.f32.mrf.mxu0
    %v272 = vadd.f32 %v248, %v271
    %273 = vdwg.mxu0
    %v274 = vtanh.pop %v272
    %v275 = vld [vmem:[#allocation13] sm:$0xff]
    %v276 = vld [vmem:[#allocation13 + $0x8] sm:$0xff]
    %v277 = vld [vmem:[#allocation13 + $0x10] sm:$0xff]
    %v278 = vld [vmem:[#allocation13 + $0x18] sm:$0xff]
    %v279 = vld [vmem:[#allocation13 + $0x20] sm:$0xff]
    %v280 = vld [vmem:[#allocation13 + $0x28] sm:$0xff]
    %v281 = vld [vmem:[#allocation13 + $0x30] sm:$0xff]
    %v282 = vld [vmem:[#allocation13 + $0x38] sm:$0xff]
    %v283 = vld [vmem:[#allocation13 + $0x40] sm:$0xff]
    %v284 = vld [vmem:[#allocation13 + $0x48] sm:$0xff]
    %v285 = vld [vmem:[#allocation13 + $0x50] sm:$0xff]
    %v286 = vld [vmem:[#allocation13 + $0x58] sm:$0xff]
    %v287 = vld [vmem:[#allocation13 + $0x60] sm:$0xff]
    %v288 = vld [vmem:[#allocation13 + $0x68] sm:$0xff]
    %v289 = vld [vmem:[#allocation13 + $0x70] sm:$0xff]
    %v290 = vld [vmem:[#allocation13 + $0x78] sm:$0xff]
    %v291 = vld [vmem:[#allocation13 + $0x80] sm:$0xff]
    %v292 = vld [vmem:[#allocation13 + $0x88] sm:$0xff]
    %v293 = vld [vmem:[#allocation13 + $0x90] sm:$0xff]
    %v294 = vld [vmem:[#allocation13 + $0x98] sm:$0xff]
    %v295 = vld [vmem:[#allocation13 + $0xa0] sm:$0xff]
    %v296 = vld [vmem:[#allocation13 + $0xa8] sm:$0xff]
    %v297 = vld [vmem:[#allocation13 + $0xb0] sm:$0xff]
    %v298 = vld [vmem:[#allocation13 + $0xb8] sm:$0xff]
    %v299 = vld [vmem:[#allocation13 + $0xc0] sm:$0xff]
    %v300 = vld [vmem:[#allocation13 + $0xc8] sm:$0xff]
    %v301 = vld [vmem:[#allocation13 + $0xd0] sm:$0xff]
    %v302 = vld [vmem:[#allocation13 + $0xd8] sm:$0xff]
    %v303 = vld [vmem:[#allocation13 + $0xe0] sm:$0xff]
    %v304 = vld [vmem:[#allocation13 + $0xe8] sm:$0xff]
    %v305 = vld [vmem:[#allocation13 + $0xf0] sm:$0xff]
    %v306 = vld [vmem:[#allocation13 + $0xf8] sm:$0xff]
    %v307 = vld [vmem:[%s7] sm:$0x3]
    %v309 = vperm.slane %v307, 0
    %v310 = vperm.slane %v307, 1
    %313 = vmatpush.msra.mxu0 %v305
    %314 = vmatpush.msra.mxu0 %v303
    %315 = vmatpush.msra.mxu0 %v301
    %316 = vmatpush.msra.mxu0 %v299
    %317 = vmatpush.msra.mxu0 %v297
    %318 = vmatpush.msra.mxu0 %v295
    %319 = vmatpush.msra.mxu0 %v293
    %320 = vmatpush.msra.mxu0 %v291
    %321 = vmatpush.msra.mxu0 %v289
    %322 = vmatpush.msra.mxu0 %v287
    %323 = vmatpush.msra.mxu0 %v285
    %324 = vmatpush.msra.mxu0 %v283
    %325 = vmatpush.msra.mxu0 %v281
    %326 = vmatpush.msra.mxu0 %v279
    %327 = vmatpush.msra.mxu0 %v277
    %328 = vmatpush.msra.mxu0 %v275
    %329 = vmatmul.f32.gmra.mxu0 %v274
    %v330 = vpop.f32.mrf.mxu0
    %v331 = vadd.f32 %v309, %v330
    %332 = vdwg.mxu0
    %333 = vmatpush.msra.mxu0 %v306
    %334 = vmatpush.msra.mxu0 %v304
    %335 = vmatpush.msra.mxu0 %v302
    %336 = vmatpush.msra.mxu0 %v300
    %337 = vmatpush.msra.mxu0 %v298
    %338 = vmatpush.msra.mxu0 %v296
    %339 = vmatpush.msra.mxu0 %v294
    %340 = vmatpush.msra.mxu0 %v292
    %341 = vmatpush.msra.mxu0 %v290
    %342 = vmatpush.msra.mxu0 %v288
    %343 = vmatpush.msra.mxu0 %v286
    %344 = vmatpush.msra.mxu0 %v284
    %345 = vmatpush.msra.mxu0 %v282
    %346 = vmatpush.msra.mxu0 %v280
    %347 = vmatpush.msra.mxu0 %v278
    %348 = vmatpush.msra.mxu0 %v276
    %349 = vmatmul.f32.gmra.mxu0 %v274
    %v350 = vpop.f32.mrf.mxu0
    %v351 = vadd.f32 %v310, %v350
    %352 = vdwg.mxu0
    %353 = vst [vmem:[#allocation23] sm:$0xff] %v331
    %354 = vst [vmem:[#allocation23 + $0x8] sm:$0xff] %v351
    %v355 = vld [vmem:[#allocation7] sm:$0xff]
    %v356 = vmul.f32 %v351, 0.5
    %v357 = vmul.f32 %v356, 1.442695
    %v358 = vpow.pop %v357
    %v359 = vmul.f32 %v355, %v358
    %v360 = vadd.f32 %v359, %v331
    %v361 = vld [vmem:[#allocation5] sm:$0xff]
    %v362 = vld [vmem:[#allocation5 + $0x8] sm:$0xff]
    %v363 = vld [vmem:[#allocation14] sm:$0xff]
    %v364 = vld [vmem:[#allocation14 + $0x8] sm:$0xff]
    %v365 = vld [vmem:[#allocation14 + $0x10] sm:$0xff]
    %v366 = vld [vmem:[#allocation14 + $0x18] sm:$0xff]
    %v367 = vld [vmem:[#allocation14 + $0x20] sm:$0xff]
    %v368 = vld [vmem:[#allocation14 + $0x28] sm:$0xff]
    %v369 = vld [vmem:[#allocation14 + $0x30] sm:$0xff]
    %v370 = vld [vmem:[#allocation14 + $0x38] sm:$0xff]
    %v371 = vld [vmem:[#allocation14 + $0x40] sm:$0xff]
    %v372 = vld [vmem:[#allocation14 + $0x48] sm:$0xff]
    %v373 = vld [vmem:[#allocation14 + $0x50] sm:$0xff]
    %v374 = vld [vmem:[#allocation14 + $0x58] sm:$0xff]
    %v375 = vld [vmem:[#allocation14 + $0x60] sm:$0xff]
    %v376 = vld [vmem:[#allocation14 + $0x68] sm:$0xff]
    %v377 = vld [vmem:[#allocation14 + $0x70] sm:$0xff]
    %v378 = vld [vmem:[#allocation14 + $0x78] sm:$0xff]
    %v379 = vld [vmem:[#allocation14 + $0x80] sm:$0xff]
    %v380 = vld [vmem:[#allocation14 + $0x88] sm:$0xff]
    %v381 = vld [vmem:[#allocation14 + $0x90] sm:$0xff]
    %v382 = vld [vmem:[#allocation14 + $0x98] sm:$0xff]
    %v383 = vld [vmem:[#allocation14 + $0xa0] sm:$0xff]
    %v384 = vld [vmem:[#allocation14 + $0xa8] sm:$0xff]
    %v385 = vld [vmem:[#allocation14 + $0xb0] sm:$0xff]
    %v386 = vld [vmem:[#allocation14 + $0xb8] sm:$0xff]
    %v387 = vld [vmem:[#allocation14 + $0xc0] sm:$0xff]
    %v388 = vld [vmem:[#allocation14 + $0xc8] sm:$0xff]
    %v389 = vld [vmem:[#allocation14 + $0xd0] sm:$0xff]
    %v390 = vld [vmem:[#allocation14 + $0xd8] sm:$0xff]
    %v391 = vld [vmem:[#allocation14 + $0xe0] sm:$0xff]
    %v392 = vld [vmem:[#allocation14 + $0xe8] sm:$0xff]
    %v393 = vld [vmem:[#allocation14 + $0xf0] sm:$0xff]
    %v394 = vld [vmem:[#allocation14 + $0xf8] sm:$0xff]
    %v395 = vld [vmem:[#allocation14 + $0x100] sm:$0xff]
    %v396 = vld [vmem:[#allocation14 + $0x108] sm:$0xff]
    %v397 = vld [vmem:[#allocation14 + $0x110] sm:$0xff]
    %v398 = vld [vmem:[#allocation14 + $0x118] sm:$0xff]
    %v399 = vld [vmem:[#allocation14 + $0x120] sm:$0xff]
    %v400 = vld [vmem:[#allocation14 + $0x128] sm:$0xff]
    %v401 = vld [vmem:[#allocation14 + $0x130] sm:$0xff]
    %v402 = vld [vmem:[#allocation14 + $0x138] sm:$0xff]
    %v403 = vld [vmem:[#allocation14 + $0x140] sm:$0xff]
    %v404 = vld [vmem:[#allocation14 + $0x148] sm:$0xff]
    %v405 = vld [vmem:[#allocation14 + $0x150] sm:$0xff]
    %v406 = vld [vmem:[#allocation14 + $0x158] sm:$0xff]
    %v407 = vld [vmem:[#allocation14 + $0x160] sm:$0xff]
    %v408 = vld [vmem:[#allocation14 + $0x168] sm:$0xff]
    %v409 = vld [vmem:[#allocation14 + $0x170] sm:$0xff]
    %v410 = vld [vmem:[#allocation14 + $0x178] sm:$0xff]
    %v411 = vld [vmem:[#allocation14 + $0x180] sm:$0xff]
    %v412 = vld [vmem:[#allocation14 + $0x188] sm:$0xff]
    %v413 = vld [vmem:[#allocation14 + $0x190] sm:$0xff]
    %v414 = vld [vmem:[#allocation14 + $0x198] sm:$0xff]
    %v415 = vld [vmem:[#allocation14 + $0x1a0] sm:$0xff]
    %v416 = vld [vmem:[#allocation14 + $0x1a8] sm:$0xff]
    %v417 = vld [vmem:[#allocation14 + $0x1b0] sm:$0xff]
    %v418 = vld [vmem:[#allocation14 + $0x1b8] sm:$0xff]
    %v419 = vld [vmem:[#allocation14 + $0x1c0] sm:$0xff]
    %v420 = vld [vmem:[#allocation14 + $0x1c8] sm:$0xff]
    %v421 = vld [vmem:[#allocation14 + $0x1d0] sm:$0xff]
    %v422 = vld [vmem:[#allocation14 + $0x1d8] sm:$0xff]
    %v423 = vld [vmem:[#allocation14 + $0x1e0] sm:$0xff]
    %v424 = vld [vmem:[#allocation14 + $0x1e8] sm:$0xff]
    %v425 = vld [vmem:[#allocation14 + $0x1f0] sm:$0xff]
    %v426 = vld [vmem:[#allocation14 + $0x1f8] sm:$0xff]
    %v427 = vld [vmem:[#allocation14 + $0x200] sm:$0xff]
    %v428 = vld [vmem:[#allocation14 + $0x208] sm:$0xff]
    %v429 = vld [vmem:[#allocation14 + $0x210] sm:$0xff]
    %v430 = vld [vmem:[#allocation14 + $0x218] sm:$0xff]
    %v431 = vld [vmem:[#allocation14 + $0x220] sm:$0xff]
    %v432 = vld [vmem:[#allocation14 + $0x228] sm:$0xff]
    %v433 = vld [vmem:[#allocation14 + $0x230] sm:$0xff]
    %v434 = vld [vmem:[#allocation14 + $0x238] sm:$0xff]
    %v435 = vld [vmem:[#allocation14 + $0x240] sm:$0xff]
    %v436 = vld [vmem:[#allocation14 + $0x248] sm:$0xff]
    %v437 = vld [vmem:[#allocation14 + $0x250] sm:$0xff]
    %v438 = vld [vmem:[#allocation14 + $0x258] sm:$0xff]
    %v439 = vld [vmem:[#allocation14 + $0x260] sm:$0xff]
    %v440 = vld [vmem:[#allocation14 + $0x268] sm:$0xff]
    %v441 = vld [vmem:[#allocation14 + $0x270] sm:$0xff]
    %v442 = vld [vmem:[#allocation14 + $0x278] sm:$0xff]
    %v443 = vld [vmem:[#allocation14 + $0x280] sm:$0xff]
    %v444 = vld [vmem:[#allocation14 + $0x288] sm:$0xff]
    %v445 = vld [vmem:[#allocation14 + $0x290] sm:$0xff]
    %v446 = vld [vmem:[#allocation14 + $0x298] sm:$0xff]
    %v447 = vld [vmem:[#allocation14 + $0x2a0] sm:$0xff]
    %v448 = vld [vmem:[#allocation14 + $0x2a8] sm:$0xff]
    %v449 = vld [vmem:[#allocation14 + $0x2b0] sm:$0xff]
    %v450 = vld [vmem:[#allocation14 + $0x2b8] sm:$0xff]
    %v451 = vld [vmem:[#allocation14 + $0x2c0] sm:$0xff]
    %v452 = vld [vmem:[#allocation14 + $0x2c8] sm:$0xff]
    %v453 = vld [vmem:[#allocation14 + $0x2d0] sm:$0xff]
    %v454 = vld [vmem:[#allocation14 + $0x2d8] sm:$0xff]
    %v455 = vld [vmem:[#allocation14 + $0x2e0] sm:$0xff]
    %v456 = vld [vmem:[#allocation14 + $0x2e8] sm:$0xff]
    %v457 = vld [vmem:[#allocation14 + $0x2f0] sm:$0xff]
    %v458 = vld [vmem:[#allocation14 + $0x2f8] sm:$0xff]
    %v459 = vld [vmem:[#allocation14 + $0x300] sm:$0xff]
    %v460 = vld [vmem:[#allocation14 + $0x308] sm:$0xff]
    %v461 = vld [vmem:[#allocation14 + $0x310] sm:$0xff]
    %v462 = vld [vmem:[#allocation14 + $0x318] sm:$0xff]
    %v463 = vld [vmem:[#allocation14 + $0x320] sm:$0xff]
    %v464 = vld [vmem:[#allocation14 + $0x328] sm:$0xff]
    %v465 = vld [vmem:[#allocation14 + $0x330] sm:$0xff]
    %v466 = vld [vmem:[#allocation14 + $0x338] sm:$0xff]
    %v467 = vld [vmem:[#allocation14 + $0x340] sm:$0xff]
    %v468 = vld [vmem:[#allocation14 + $0x348] sm:$0xff]
    %v469 = vld [vmem:[#allocation14 + $0x350] sm:$0xff]
    %v470 = vld [vmem:[#allocation14 + $0x358] sm:$0xff]
    %v471 = vld [vmem:[#allocation14 + $0x360] sm:$0xff]
    %v472 = vld [vmem:[#allocation14 + $0x368] sm:$0xff]
    %v473 = vld [vmem:[#allocation14 + $0x370] sm:$0xff]
    %v474 = vld [vmem:[#allocation14 + $0x378] sm:$0xff]
    %v475 = vld [vmem:[#allocation14 + $0x380] sm:$0xff]
    %v476 = vld [vmem:[#allocation14 + $0x388] sm:$0xff]
    %v477 = vld [vmem:[#allocation14 + $0x390] sm:$0xff]
    %v478 = vld [vmem:[#allocation14 + $0x398] sm:$0xff]
    %v479 = vld [vmem:[#allocation14 + $0x3a0] sm:$0xff]
    %v480 = vld [vmem:[#allocation14 + $0x3a8] sm:$0xff]
    %v481 = vld [vmem:[#allocation14 + $0x3b0] sm:$0xff]
    %v482 = vld [vmem:[#allocation14 + $0x3b8] sm:$0xff]
    %v483 = vld [vmem:[#allocation14 + $0x3c0] sm:$0xff]
    %v484 = vld [vmem:[#allocation14 + $0x3c8] sm:$0xff]
    %v485 = vld [vmem:[#allocation14 + $0x3d0] sm:$0xff]
    %v486 = vld [vmem:[#allocation14 + $0x3d8] sm:$0xff]
    %v487 = vld [vmem:[#allocation14 + $0x3e0] sm:$0xff]
    %v488 = vld [vmem:[#allocation14 + $0x3e8] sm:$0xff]
    %v489 = vld [vmem:[#allocation14 + $0x3f0] sm:$0xff]
    %v490 = vld [vmem:[#allocation14 + $0x3f8] sm:$0xff]
    %v491 = vld [vmem:[%s9] sm:$0xf]
    %v493 = vperm.slane %v491, 0
    %v494 = vperm.slane %v491, 1
    %v495 = vperm.slane %v491, 2
    %v496 = vperm.slane %v491, 3
    %501 = vmatpush.msra.mxu0 %v423
    %502 = vmatpush.msra.mxu0 %v419
    %503 = vmatpush.msra.mxu0 %v415
    %504 = vmatpush.msra.mxu0 %v411
    %505 = vmatpush.msra.mxu0 %v407
    %506 = vmatpush.msra.mxu0 %v403
    %507 = vmatpush.msra.mxu0 %v399
    %508 = vmatpush.msra.mxu0 %v395
    %509 = vmatpush.msra.mxu0 %v391
    %510 = vmatpush.msra.mxu0 %v387
    %511 = vmatpush.msra.mxu0 %v383
    %512 = vmatpush.msra.mxu0 %v379
    %513 = vmatpush.msra.mxu0 %v375
    %514 = vmatpush.msra.mxu0 %v371
    %515 = vmatpush.msra.mxu0 %v367
    %516 = vmatpush.msra.mxu0 %v363
    %517 = vmatmul.f32.gmra.mxu0 %v361
    %v518 = vpop.f32.mrf.mxu0
    %v519 = vadd.f32 %v493, %v518
    %520 = vdwg.mxu0
    %521 = vmatpush.msra.mxu0 %v487
    %522 = vmatpush.msra.mxu0 %v483
    %523 = vmatpush.msra.mxu0 %v479
    %524 = vmatpush.msra.mxu0 %v475
    %525 = vmatpush.msra.mxu0 %v471
    %526 = vmatpush.msra.mxu0 %v467
    %527 = vmatpush.msra.mxu0 %v463
    %528 = vmatpush.msra.mxu0 %v459
    %529 = vmatpush.msra.mxu0 %v455
    %530 = vmatpush.msra.mxu0 %v451
    %531 = vmatpush.msra.mxu0 %v447
    %532 = vmatpush.msra.mxu0 %v443
    %533 = vmatpush.msra.mxu0 %v439
    %534 = vmatpush.msra.mxu0 %v435
    %535 = vmatpush.msra.mxu0 %v431
    %536 = vmatpush.msra.mxu0 %v427
    %537 = vmatmul.f32.gmra.mxu0 %v362
    %v538 = vpop.f32.mrf.mxu0
    %v539 = vadd.f32 %v519, %v538
    %540 = vdwg.mxu0
    %541 = vmatpush.msra.mxu0 %v424
    %542 = vmatpush.msra.mxu0 %v420
    %543 = vmatpush.msra.mxu0 %v416
    %544 = vmatpush.msra.mxu0 %v412
    %545 = vmatpush.msra.mxu0 %v408
    %546 = vmatpush.msra.mxu0 %v404
    %547 = vmatpush.msra.mxu0 %v400
    %548 = vmatpush.msra.mxu0 %v396
    %549 = vmatpush.msra.mxu0 %v392
    %550 = vmatpush.msra.mxu0 %v388
    %551 = vmatpush.msra.mxu0 %v384
    %552 = vmatpush.msra.mxu0 %v380
    %553 = vmatpush.msra.mxu0 %v376
    %554 = vmatpush.msra.mxu0 %v372
    %555 = vmatpush.msra.mxu0 %v368
    %556 = vmatpush.msra.mxu0 %v364
    %557 = vmatmul.f32.gmra.mxu0 %v361
    %v558 = vpop.f32.mrf.mxu0
    %v559 = vadd.f32 %v494, %v558
    %560 = vdwg.mxu0
    %561 = vmatpush.msra.mxu0 %v488
    %562 = vmatpush.msra.mxu0 %v484
    %563 = vmatpush.msra.mxu0 %v480
    %564 = vmatpush.msra.mxu0 %v476
    %565 = vmatpush.msra.mxu0 %v472
    %566 = vmatpush.msra.mxu0 %v468
    %567 = vmatpush.msra.mxu0 %v464
    %568 = vmatpush.msra.mxu0 %v460
    %569 = vmatpush.msra.mxu0 %v456
    %570 = vmatpush.msra.mxu0 %v452
    %571 = vmatpush.msra.mxu0 %v448
    %572 = vmatpush.msra.mxu0 %v444
    %573 = vmatpush.msra.mxu0 %v440
    %574 = vmatpush.msra.mxu0 %v436
    %575 = vmatpush.msra.mxu0 %v432
    %576 = vmatpush.msra.mxu0 %v428
    %577 = vmatmul.f32.gmra.mxu0 %v362
    %v578 = vpop.f32.mrf.mxu0
    %v579 = vadd.f32 %v559, %v578
    %580 = vdwg.mxu0
    %581 = vmatpush.msra.mxu0 %v425
    %582 = vmatpush.msra.mxu0 %v421
    %583 = vmatpush.msra.mxu0 %v417
    %584 = vmatpush.msra.mxu0 %v413
    %585 = vmatpush.msra.mxu0 %v409
    %586 = vmatpush.msra.mxu0 %v405
    %587 = vmatpush.msra.mxu0 %v401
    %588 = vmatpush.msra.mxu0 %v397
    %589 = vmatpush.msra.mxu0 %v393
    %590 = vmatpush.msra.mxu0 %v389
    %591 = vmatpush.msra.mxu0 %v385
    %592 = vmatpush.msra.mxu0 %v381
    %593 = vmatpush.msra.mxu0 %v377
    %594 = vmatpush.msra.mxu0 %v373
    %595 = vmatpush.msra.mxu0 %v369
    %596 = vmatpush.msra.mxu0 %v365
    %597 = vmatmul.f32.gmra.mxu0 %v361
    %v598 = vpop.f32.mrf.mxu0
    %v599 = vadd.f32 %v495, %v598
    %600 = vdwg.mxu0
    %601 = vmatpush.msra.mxu0 %v489
    %602 = vmatpush.msra.mxu0 %v485
    %603 = vmatpush.msra.mxu0 %v481
    %604 = vmatpush.msra.mxu0 %v477
    %605 = vmatpush.msra.mxu0 %v473
    %606 = vmatpush.msra.mxu0 %v469
    %607 = vmatpush.msra.mxu0 %v465
    %608 = vmatpush.msra.mxu0 %v461
    %609 = vmatpush.msra.mxu0 %v457
    %610 = vmatpush.msra.mxu0 %v453
    %611 = vmatpush.msra.mxu0 %v449
    %612 = vmatpush.msra.mxu0 %v445
    %613 = vmatpush.msra.mxu0 %v441
    %614 = vmatpush.msra.mxu0 %v437
    %615 = vmatpush.msra.mxu0 %v433
    %616 = vmatpush.msra.mxu0 %v429
    %617 = vmatmul.f32.gmra.mxu0 %v362
    %v618 = vpop.f32.mrf.mxu0
    %v619 = vadd.f32 %v599, %v618
    %620 = vdwg.mxu0
    %621 = vmatpush.msra.mxu0 %v426
    %622 = vmatpush.msra.mxu0 %v422
    %623 = vmatpush.msra.mxu0 %v418
    %624 = vmatpush.msra.mxu0 %v414
    %625 = vmatpush.msra.mxu0 %v410
    %626 = vmatpush.msra.mxu0 %v406
    %627 = vmatpush.msra.mxu0 %v402
    %628 = vmatpush.msra.mxu0 %v398
    %629 = vmatpush.msra.mxu0 %v394
    %630 = vmatpush.msra.mxu0 %v390
    %631 = vmatpush.msra.mxu0 %v386
    %632 = vmatpush.msra.mxu0 %v382
    %633 = vmatpush.msra.mxu0 %v378
    %634 = vmatpush.msra.mxu0 %v374
    %635 = vmatpush.msra.mxu0 %v370
    %636 = vmatpush.msra.mxu0 %v366
    %637 = vmatmul.f32.gmra.mxu0 %v361
    %v638 = vpop.f32.mrf.mxu0
    %v639 = vadd.f32 %v496, %v638
    %640 = vdwg.mxu0
    %641 = vmatpush.msra.mxu0 %v490
    %642 = vmatpush.msra.mxu0 %v486
    %643 = vmatpush.msra.mxu0 %v482
    %644 = vmatpush.msra.mxu0 %v478
    %645 = vmatpush.msra.mxu0 %v474
    %646 = vmatpush.msra.mxu0 %v470
    %647 = vmatpush.msra.mxu0 %v466
    %648 = vmatpush.msra.mxu0 %v462
    %649 = vmatpush.msra.mxu0 %v458
    %650 = vmatpush.msra.mxu0 %v454
    %651 = vmatpush.msra.mxu0 %v450
    %652 = vmatpush.msra.mxu0 %v446
    %653 = vmatpush.msra.mxu0 %v442
    %654 = vmatpush.msra.mxu0 %v438
    %655 = vmatpush.msra.mxu0 %v434
    %656 = vmatpush.msra.mxu0 %v430
    %657 = vmatmul.f32.gmra.mxu0 %v362
    %v658 = vpop.f32.mrf.mxu0
    %v659 = vadd.f32 %v639, %v658
    %660 = vdwg.mxu0
    %v661 = vmax.f32 %v539, 0.0
    %v662 = vmax.f32 %v579, 0.0
    %v663 = vmax.f32 %v619, 0.0
    %v664 = vmax.f32 %v659, 0.0
    %v665 = vld [vmem:[#allocation16] sm:$0xff]
    %v666 = vld [vmem:[#allocation16 + $0x8] sm:$0xff]
    %v667 = vld [vmem:[#allocation16 + $0x10] sm:$0xff]
    %v668 = vld [vmem:[#allocation16 + $0x18] sm:$0xff]
    %v669 = vld [vmem:[#allocation16 + $0x20] sm:$0xff]
    %v670 = vld [vmem:[#allocation16 + $0x28] sm:$0xff]
    %v671 = vld [vmem:[#allocation16 + $0x30] sm:$0xff]
    %v672 = vld [vmem:[#allocation16 + $0x38] sm:$0xff]
    %v673 = vld [vmem:[#allocation16 + $0x40] sm:$0xff]
    %v674 = vld [vmem:[#allocation16 + $0x48] sm:$0xff]
    %v675 = vld [vmem:[#allocation16 + $0x50] sm:$0xff]
    %v676 = vld [vmem:[#allocation16 + $0x58] sm:$0xff]
    %v677 = vld [vmem:[#allocation16 + $0x60] sm:$0xff]
    %v678 = vld [vmem:[#allocation16 + $0x68] sm:$0xff]
    %v679 = vld [vmem:[#allocation16 + $0x70] sm:$0xff]
    %v680 = vld [vmem:[#allocation16 + $0x78] sm:$0xff]
    %v681 = vld [vmem:[#allocation16 + $0x80] sm:$0xff]
    %v682 = vld [vmem:[#allocation16 + $0x88] sm:$0xff]
    %v683 = vld [vmem:[#allocation16 + $0x90] sm:$0xff]
    %v684 = vld [vmem:[#allocation16 + $0x98] sm:$0xff]
    %v685 = vld [vmem:[#allocation16 + $0xa0] sm:$0xff]
    %v686 = vld [vmem:[#allocation16 + $0xa8] sm:$0xff]
    %v687 = vld [vmem:[#allocation16 + $0xb0] sm:$0xff]
    %v688 = vld [vmem:[#allocation16 + $0xb8] sm:$0xff]
    %v689 = vld [vmem:[#allocation16 + $0xc0] sm:$0xff]
    %v690 = vld [vmem:[#allocation16 + $0xc8] sm:$0xff]
    %v691 = vld [vmem:[#allocation16 + $0xd0] sm:$0xff]
    %v692 = vld [vmem:[#allocation16 + $0xd8] sm:$0xff]
    %v693 = vld [vmem:[#allocation16 + $0xe0] sm:$0xff]
    %v694 = vld [vmem:[#allocation16 + $0xe8] sm:$0xff]
    %v695 = vld [vmem:[#allocation16 + $0xf0] sm:$0xff]
    %v696 = vld [vmem:[#allocation16 + $0xf8] sm:$0xff]
    %v697 = vld [vmem:[#allocation16 + $0x100] sm:$0xff]
    %v698 = vld [vmem:[#allocation16 + $0x108] sm:$0xff]
    %v699 = vld [vmem:[#allocation16 + $0x110] sm:$0xff]
    %v700 = vld [vmem:[#allocation16 + $0x118] sm:$0xff]
    %v701 = vld [vmem:[#allocation16 + $0x120] sm:$0xff]
    %v702 = vld [vmem:[#allocation16 + $0x128] sm:$0xff]
    %v703 = vld [vmem:[#allocation16 + $0x130] sm:$0xff]
    %v704 = vld [vmem:[#allocation16 + $0x138] sm:$0xff]
    %v705 = vld [vmem:[#allocation16 + $0x140] sm:$0xff]
    %v706 = vld [vmem:[#allocation16 + $0x148] sm:$0xff]
    %v707 = vld [vmem:[#allocation16 + $0x150] sm:$0xff]
    %v708 = vld [vmem:[#allocation16 + $0x158] sm:$0xff]
    %v709 = vld [vmem:[#allocation16 + $0x160] sm:$0xff]
    %v710 = vld [vmem:[#allocation16 + $0x168] sm:$0xff]
    %v711 = vld [vmem:[#allocation16 + $0x170] sm:$0xff]
    %v712 = vld [vmem:[#allocation16 + $0x178] sm:$0xff]
    %v713 = vld [vmem:[#allocation16 + $0x180] sm:$0xff]
    %v714 = vld [vmem:[#allocation16 + $0x188] sm:$0xff]
    %v715 = vld [vmem:[#allocation16 + $0x190] sm:$0xff]
    %v716 = vld [vmem:[#allocation16 + $0x198] sm:$0xff]
    %v717 = vld [vmem:[#allocation16 + $0x1a0] sm:$0xff]
    %v718 = vld [vmem:[#allocation16 + $0x1a8] sm:$0xff]
    %v719 = vld [vmem:[#allocation16 + $0x1b0] sm:$0xff]
    %v720 = vld [vmem:[#allocation16 + $0x1b8] sm:$0xff]
    %v721 = vld [vmem:[#allocation16 + $0x1c0] sm:$0xff]
    %v722 = vld [vmem:[#allocation16 + $0x1c8] sm:$0xff]
    %v723 = vld [vmem:[#allocation16 + $0x1d0] sm:$0xff]
    %v724 = vld [vmem:[#allocation16 + $0x1d8] sm:$0xff]
    %v725 = vld [vmem:[#allocation16 + $0x1e0] sm:$0xff]
    %v726 = vld [vmem:[#allocation16 + $0x1e8] sm:$0xff]
    %v727 = vld [vmem:[#allocation16 + $0x1f0] sm:$0xff]
    %v728 = vld [vmem:[#allocation16 + $0x1f8] sm:$0xff]
    %v729 = vld [vmem:[#allocation16 + $0x200] sm:$0xff]
    %v730 = vld [vmem:[#allocation16 + $0x208] sm:$0xff]
    %v731 = vld [vmem:[#allocation16 + $0x210] sm:$0xff]
    %v732 = vld [vmem:[#allocation16 + $0x218] sm:$0xff]
    %v733 = vld [vmem:[#allocation16 + $0x220] sm:$0xff]
    %v734 = vld [vmem:[#allocation16 + $0x228] sm:$0xff]
    %v735 = vld [vmem:[#allocation16 + $0x230] sm:$0xff]
    %v736 = vld [vmem:[#allocation16 + $0x238] sm:$0xff]
    %v737 = vld [vmem:[#allocation16 + $0x240] sm:$0xff]
    %v738 = vld [vmem:[#allocation16 + $0x248] sm:$0xff]
    %v739 = vld [vmem:[#allocation16 + $0x250] sm:$0xff]
    %v740 = vld [vmem:[#allocation16 + $0x258] sm:$0xff]
    %v741 = vld [vmem:[#allocation16 + $0x260] sm:$0xff]
    %v742 = vld [vmem:[#allocation16 + $0x268] sm:$0xff]
    %v743 = vld [vmem:[#allocation16 + $0x270] sm:$0xff]
    %v744 = vld [vmem:[#allocation16 + $0x278] sm:$0xff]
    %v745 = vld [vmem:[#allocation16 + $0x280] sm:$0xff]
    %v746 = vld [vmem:[#allocation16 + $0x288] sm:$0xff]
    %v747 = vld [vmem:[#allocation16 + $0x290] sm:$0xff]
    %v748 = vld [vmem:[#allocation16 + $0x298] sm:$0xff]
    %v749 = vld [vmem:[#allocation16 + $0x2a0] sm:$0xff]
    %v750 = vld [vmem:[#allocation16 + $0x2a8] sm:$0xff]
    %v751 = vld [vmem:[#allocation16 + $0x2b0] sm:$0xff]
    %v752 = vld [vmem:[#allocation16 + $0x2b8] sm:$0xff]
    %v753 = vld [vmem:[#allocation16 + $0x2c0] sm:$0xff]
    %v754 = vld [vmem:[#allocation16 + $0x2c8] sm:$0xff]
    %v755 = vld [vmem:[#allocation16 + $0x2d0] sm:$0xff]
    %v756 = vld [vmem:[#allocation16 + $0x2d8] sm:$0xff]
    %v757 = vld [vmem:[#allocation16 + $0x2e0] sm:$0xff]
    %v758 = vld [vmem:[#allocation16 + $0x2e8] sm:$0xff]
    %v759 = vld [vmem:[#allocation16 + $0x2f0] sm:$0xff]
    %v760 = vld [vmem:[#allocation16 + $0x2f8] sm:$0xff]
    %v761 = vld [vmem:[#allocation16 + $0x300] sm:$0xff]
    %v762 = vld [vmem:[#allocation16 + $0x308] sm:$0xff]
    %v763 = vld [vmem:[#allocation16 + $0x310] sm:$0xff]
    %v764 = vld [vmem:[#allocation16 + $0x318] sm:$0xff]
    %v765 = vld [vmem:[#allocation16 + $0x320] sm:$0xff]
    %v766 = vld [vmem:[#allocation16 + $0x328] sm:$0xff]
    %v767 = vld [vmem:[#allocation16 + $0x330] sm:$0xff]
    %v768 = vld [vmem:[#allocation16 + $0x338] sm:$0xff]
    %v769 = vld [vmem:[#allocation16 + $0x340] sm:$0xff]
    %v770 = vld [vmem:[#allocation16 + $0x348] sm:$0xff]
    %v771 = vld [vmem:[#allocation16 + $0x350] sm:$0xff]
    %v772 = vld [vmem:[#allocation16 + $0x358] sm:$0xff]
    %v773 = vld [vmem:[#allocation16 + $0x360] sm:$0xff]
    %v774 = vld [vmem:[#allocation16 + $0x368] sm:$0xff]
    %v775 = vld [vmem:[#allocation16 + $0x370] sm:$0xff]
    %v776 = vld [vmem:[#allocation16 + $0x378] sm:$0xff]
    %v777 = vld [vmem:[#allocation16 + $0x380] sm:$0xff]
    %v778 = vld [vmem:[#allocation16 + $0x388] sm:$0xff]
    %v779 = vld [vmem:[#allocation16 + $0x390] sm:$0xff]
    %v780 = vld [vmem:[#allocation16 + $0x398] sm:$0xff]
    %v781 = vld [vmem:[#allocation16 + $0x3a0] sm:$0xff]
    %v782 = vld [vmem:[#allocation16 + $0x3a8] sm:$0xff]
    %v783 = vld [vmem:[#allocation16 + $0x3b0] sm:$0xff]
    %v784 = vld [vmem:[#allocation16 + $0x3b8] sm:$0xff]
    %v785 = vld [vmem:[#allocation16 + $0x3c0] sm:$0xff]
    %v786 = vld [vmem:[#allocation16 + $0x3c8] sm:$0xff]
    %v787 = vld [vmem:[#allocation16 + $0x3d0] sm:$0xff]
    %v788 = vld [vmem:[#allocation16 + $0x3d8] sm:$0xff]
    %v789 = vld [vmem:[#allocation16 + $0x3e0] sm:$0xff]
    %v790 = vld [vmem:[#allocation16 + $0x3e8] sm:$0xff]
    %v791 = vld [vmem:[#allocation16 + $0x3f0] sm:$0xff]
    %v792 = vld [vmem:[#allocation16 + $0x3f8] sm:$0xff]
    %v793 = vld [vmem:[%s11] sm:$0x3]
    %v795 = vperm.slane %v793, 0
    %v796 = vperm.slane %v793, 1
    %799 = vmatpush.msra.mxu0 %v695
    %800 = vmatpush.msra.mxu0 %v693
    %801 = vmatpush.msra.mxu0 %v691
    %802 = vmatpush.msra.mxu0 %v689
    %803 = vmatpush.msra.mxu0 %v687
    %804 = vmatpush.msra.mxu0 %v685
    %805 = vmatpush.msra.mxu0 %v683
    %806 = vmatpush.msra.mxu0 %v681
    %807 = vmatpush.msra.mxu0 %v679
    %808 = vmatpush.msra.mxu0 %v677
    %809 = vmatpush.msra.mxu0 %v675
    %810 = vmatpush.msra.mxu0 %v673
    %811 = vmatpush.msra.mxu0 %v671
    %812 = vmatpush.msra.mxu0 %v669
    %813 = vmatpush.msra.mxu0 %v667
    %814 = vmatpush.msra.mxu0 %v665
    %815 = vmatmul.f32.gmra.mxu0 %v661
    %v816 = vpop.f32.mrf.mxu0
    %v817 = vadd.f32 %v795, %v816
    %818 = vdwg.mxu0
    %819 = vmatpush.msra.mxu0 %v727
    %820 = vmatpush.msra.mxu0 %v725
    %821 = vmatpush.msra.mxu0 %v723
    %822 = vmatpush.msra.mxu0 %v721
    %823 = vmatpush.msra.mxu0 %v719
    %824 = vmatpush.msra.mxu0 %v717
    %825 = vmatpush.msra.mxu0 %v715
    %826 = vmatpush.msra.mxu0 %v713
    %827 = vmatpush.msra.mxu0 %v711
    %828 = vmatpush.msra.mxu0 %v709
    %829 = vmatpush.msra.mxu0 %v707
    %830 = vmatpush.msra.mxu0 %v705
    %831 = vmatpush.msra.mxu0 %v703
    %832 = vmatpush.msra.mxu0 %v701
    %833 = vmatpush.msra.mxu0 %v699
    %834 = vmatpush.msra.mxu0 %v697
    %835 = vmatmul.f32.gmra.mxu0 %v662
    %v836 = vpop.f32.mrf.mxu0
    %v837 = vadd.f32 %v817, %v836
    %838 = vdwg.mxu0
    %839 = vmatpush.msra.mxu0 %v759
    %840 = vmatpush.msra.mxu0 %v757
    %841 = vmatpush.msra.mxu0 %v755
    %842 = vmatpush.msra.mxu0 %v753
    %843 = vmatpush.msra.mxu0 %v751
    %844 = vmatpush.msra.mxu0 %v749
    %845 = vmatpush.msra.mxu0 %v747
    %846 = vmatpush.msra.mxu0 %v745
    %847 = vmatpush.msra.mxu0 %v743
    %848 = vmatpush.msra.mxu0 %v741
    %849 = vmatpush.msra.mxu0 %v739
    %850 = vmatpush.msra.mxu0 %v737
    %851 = vmatpush.msra.mxu0 %v735
    %852 = vmatpush.msra.mxu0 %v733
    %853 = vmatpush.msra.mxu0 %v731
    %854 = vmatpush.msra.mxu0 %v729
    %855 = vmatmul.f32.gmra.mxu0 %v663
    %v856 = vpop.f32.mrf.mxu0
    %v857 = vadd.f32 %v837, %v856
    %858 = vdwg.mxu0
    %859 = vmatpush.msra.mxu0 %v791
    %860 = vmatpush.msra.mxu0 %v789
    %861 = vmatpush.msra.mxu0 %v787
    %862 = vmatpush.msra.mxu0 %v785
    %863 = vmatpush.msra.mxu0 %v783
    %864 = vmatpush.msra.mxu0 %v781
    %865 = vmatpush.msra.mxu0 %v779
    %866 = vmatpush.msra.mxu0 %v777
    %867 = vmatpush.msra.mxu0 %v775
    %868 = vmatpush.msra.mxu0 %v773
    %869 = vmatpush.msra.mxu0 %v771
    %870 = vmatpush.msra.mxu0 %v769
    %871 = vmatpush.msra.mxu0 %v767
    %872 = vmatpush.msra.mxu0 %v765
    %873 = vmatpush.msra.mxu0 %v763
    %874 = vmatpush.msra.mxu0 %v761
    %875 = vmatmul.f32.gmra.mxu0 %v664
    %v876 = vpop.f32.mrf.mxu0
    %v877 = vadd.f32 %v857, %v876
    %878 = vdwg.mxu0
    %879 = vmatpush.msra.mxu0 %v696
    %880 = vmatpush.msra.mxu0 %v694
    %881 = vmatpush.msra.mxu0 %v692
    %882 = vmatpush.msra.mxu0 %v690
    %883 = vmatpush.msra.mxu0 %v688
    %884 = vmatpush.msra.mxu0 %v686
    %885 = vmatpush.msra.mxu0 %v684
    %886 = vmatpush.msra.mxu0 %v682
    %887 = vmatpush.msra.mxu0 %v680
    %888 = vmatpush.msra.mxu0 %v678
    %889 = vmatpush.msra.mxu0 %v676
    %890 = vmatpush.msra.mxu0 %v674
    %891 = vmatpush.msra.mxu0 %v672
    %892 = vmatpush.msra.mxu0 %v670
    %893 = vmatpush.msra.mxu0 %v668
    %894 = vmatpush.msra.mxu0 %v666
    %895 = vmatmul.f32.gmra.mxu0 %v661
    %v896 = vpop.f32.mrf.mxu0
    %v897 = vadd.f32 %v796, %v896
    %898 = vdwg.mxu0
    %899 = vmatpush.msra.mxu0 %v728
    %900 = vmatpush.msra.mxu0 %v726
    %901 = vmatpush.msra.mxu0 %v724
    %902 = vmatpush.msra.mxu0 %v722
    %903 = vmatpush.msra.mxu0 %v720
    %904 = vmatpush.msra.mxu0 %v718
    %905 = vmatpush.msra.mxu0 %v716
    %906 = vmatpush.msra.mxu0 %v714
    %907 = vmatpush.msra.mxu0 %v712
    %908 = vmatpush.msra.mxu0 %v710
    %909 = vmatpush.msra.mxu0 %v708
    %910 = vmatpush.msra.mxu0 %v706
    %911 = vmatpush.msra.mxu0 %v704
    %912 = vmatpush.msra.mxu0 %v702
    %913 = vmatpush.msra.mxu0 %v700
    %914 = vmatpush.msra.mxu0 %v698
    %915 = vmatmul.f32.gmra.mxu0 %v662
    %v916 = vpop.f32.mrf.mxu0
    %v917 = vadd.f32 %v897, %v916
    %918 = vdwg.mxu0
    %919 = vmatpush.msra.mxu0 %v760
    %920 = vmatpush.msra.mxu0 %v758
    %921 = vmatpush.msra.mxu0 %v756
    %922 = vmatpush.msra.mxu0 %v754
    %923 = vmatpush.msra.mxu0 %v752
    %924 = vmatpush.msra.mxu0 %v750
    %925 = vmatpush.msra.mxu0 %v748
    %926 = vmatpush.msra.mxu0 %v746
    %927 = vmatpush.msra.mxu0 %v744
    %928 = vmatpush.msra.mxu0 %v742
    %929 = vmatpush.msra.mxu0 %v740
    %930 = vmatpush.msra.mxu0 %v738
    %931 = vmatpush.msra.mxu0 %v736
    %932 = vmatpush.msra.mxu0 %v734
    %933 = vmatpush.msra.mxu0 %v732
    %934 = vmatpush.msra.mxu0 %v730
    %935 = vmatmul.f32.gmra.mxu0 %v663
    %v936 = vpop.f32.mrf.mxu0
    %v937 = vadd.f32 %v917, %v936
    %938 = vdwg.mxu0
    %939 = vmatpush.msra.mxu0 %v792
    %940 = vmatpush.msra.mxu0 %v790
    %941 = vmatpush.msra.mxu0 %v788
    %942 = vmatpush.msra.mxu0 %v786
    %943 = vmatpush.msra.mxu0 %v784
    %944 = vmatpush.msra.mxu0 %v782
    %945 = vmatpush.msra.mxu0 %v780
    %946 = vmatpush.msra.mxu0 %v778
    %947 = vmatpush.msra.mxu0 %v776
    %948 = vmatpush.msra.mxu0 %v774
    %949 = vmatpush.msra.mxu0 %v772
    %950 = vmatpush.msra.mxu0 %v770
    %951 = vmatpush.msra.mxu0 %v768
    %952 = vmatpush.msra.mxu0 %v766
    %953 = vmatpush.msra.mxu0 %v764
    %954 = vmatpush.msra.mxu0 %v762
    %955 = vmatmul.f32.gmra.mxu0 %v664
    %v956 = vpop.f32.mrf.mxu0
    %v957 = vadd.f32 %v937, %v956
    %958 = vdwg.mxu0
    %v959 = vtanh.pop %v877
    %v960 = vld [vmem:[%s15] sm:$0x1]
    %v962 = vperm.slane %v960, 0
    %v964 = vadd.f32 %v957, %v962
    %v965 = vld [vmem:[#allocation17] sm:$0xff]
    %v966 = vld [vmem:[#allocation17 + $0x8] sm:$0xff]
    %v967 = vld [vmem:[#allocation17 + $0x10] sm:$0xff]
    %v968 = vld [vmem:[#allocation17 + $0x18] sm:$0xff]
    %v969 = vld [vmem:[#allocation17 + $0x20] sm:$0xff]
    %v970 = vld [vmem:[#allocation17 + $0x28] sm:$0xff]
    %v971 = vld [vmem:[#allocation17 + $0x30] sm:$0xff]
    %v972 = vld [vmem:[#allocation17 + $0x38] sm:$0xff]
    %v973 = vld [vmem:[#allocation17 + $0x40] sm:$0xff]
    %v974 = vld [vmem:[#allocation17 + $0x48] sm:$0xff]
    %v975 = vld [vmem:[#allocation17 + $0x50] sm:$0xff]
    %v976 = vld [vmem:[#allocation17 + $0x58] sm:$0xff]
    %v977 = vld [vmem:[#allocation17 + $0x60] sm:$0xff]
    %v978 = vld [vmem:[#allocation17 + $0x68] sm:$0xff]
    %v979 = vld [vmem:[#allocation17 + $0x70] sm:$0xff]
    %v980 = vld [vmem:[#allocation17 + $0x78] sm:$0xff]
    %v981 = vld [vmem:[#allocation17 + $0x80] sm:$0xff]
    %v982 = vld [vmem:[#allocation17 + $0x88] sm:$0xff]
    %v983 = vld [vmem:[#allocation17 + $0x90] sm:$0xff]
    %v984 = vld [vmem:[#allocation17 + $0x98] sm:$0xff]
    %v985 = vld [vmem:[#allocation17 + $0xa0] sm:$0xff]
    %v986 = vld [vmem:[#allocation17 + $0xa8] sm:$0xff]
    %v987 = vld [vmem:[#allocation17 + $0xb0] sm:$0xff]
    %v988 = vld [vmem:[#allocation17 + $0xb8] sm:$0xff]
    %v989 = vld [vmem:[#allocation17 + $0xc0] sm:$0xff]
    %v990 = vld [vmem:[#allocation17 + $0xc8] sm:$0xff]
    %v991 = vld [vmem:[#allocation17 + $0xd0] sm:$0xff]
    %v992 = vld [vmem:[#allocation17 + $0xd8] sm:$0xff]
    %v993 = vld [vmem:[#allocation17 + $0xe0] sm:$0xff]
    %v994 = vld [vmem:[#allocation17 + $0xe8] sm:$0xff]
    %v995 = vld [vmem:[#allocation17 + $0xf0] sm:$0xff]
    %v996 = vld [vmem:[#allocation17 + $0xf8] sm:$0xff]
    %v997 = vld [vmem:[%s13] sm:$0x3]
    %v999 = vperm.slane %v997, 0
    %v1000 = vperm.slane %v997, 1
    %1003 = vmatpush.msra.mxu0 %v995
    %1004 = vmatpush.msra.mxu0 %v993
    %1005 = vmatpush.msra.mxu0 %v991
    %1006 = vmatpush.msra.mxu0 %v989
    %1007 = vmatpush.msra.mxu0 %v987
    %1008 = vmatpush.msra.mxu0 %v985
    %1009 = vmatpush.msra.mxu0 %v983
    %1010 = vmatpush.msra.mxu0 %v981
    %1011 = vmatpush.msra.mxu0 %v979
    %1012 = vmatpush.msra.mxu0 %v977
    %1013 = vmatpush.msra.mxu0 %v975
    %1014 = vmatpush.msra.mxu0 %v973
    %1015 = vmatpush.msra.mxu0 %v971
    %1016 = vmatpush.msra.mxu0 %v969
    %1017 = vmatpush.msra.mxu0 %v967
    %1018 = vmatpush.msra.mxu0 %v965
    %1019 = vmatmul.f32.gmra.mxu0 %v959
    %v1020 = vpop.f32.mrf.mxu0
    %v1021 = vadd.f32 %v999, %v1020
    %1022 = vdwg.mxu0
    %1023 = vmatpush.msra.mxu0 %v996
    %1024 = vmatpush.msra.mxu0 %v994
    %1025 = vmatpush.msra.mxu0 %v992
    %1026 = vmatpush.msra.mxu0 %v990
    %1027 = vmatpush.msra.mxu0 %v988
    %1028 = vmatpush.msra.mxu0 %v986
    %1029 = vmatpush.msra.mxu0 %v984
    %1030 = vmatpush.msra.mxu0 %v982
    %1031 = vmatpush.msra.mxu0 %v980
    %1032 = vmatpush.msra.mxu0 %v978
    %1033 = vmatpush.msra.mxu0 %v976
    %1034 = vmatpush.msra.mxu0 %v974
    %1035 = vmatpush.msra.mxu0 %v972
    %1036 = vmatpush.msra.mxu0 %v970
    %1037 = vmatpush.msra.mxu0 %v968
    %1038 = vmatpush.msra.mxu0 %v966
    %1039 = vmatmul.f32.gmra.mxu0 %v959
    %v1040 = vpop.f32.mrf.mxu0
    %v1041 = vadd.f32 %v1000, %v1040
    %1042 = vdwg.mxu0
    %1043 = vst [vmem:[#allocation26] sm:$0xff] %v1021
    %1044 = vst [vmem:[#allocation26 + $0x8] sm:$0xff] %v1041
    %v1045 = vld [vmem:[#allocation8] sm:$0xff]
    %v1046 = vmul.f32 %v1041, 0.5
    %v1047 = vmul.f32 %v1046, 1.442695
    %v1048 = vpow.pop %v1047
    %v1049 = vmul.f32 %v1045, %v1048
    %v1050 = vadd.f32 %v1049, %v1021
    %v1051 = vld [vmem:[#allocation19] sm:$0xff]
    %v1052 = vld [vmem:[#allocation19 + $0x8] sm:$0xff]
    %v1053 = vld [vmem:[#allocation19 + $0x10] sm:$0xff]
    %v1054 = vld [vmem:[#allocation19 + $0x18] sm:$0xff]
    %v1055 = vld [vmem:[#allocation19 + $0x20] sm:$0xff]
    %v1056 = vld [vmem:[#allocation19 + $0x28] sm:$0xff]
    %v1057 = vld [vmem:[#allocation19 + $0x30] sm:$0xff]
    %v1058 = vld [vmem:[#allocation19 + $0x38] sm:$0xff]
    %v1059 = vld [vmem:[#allocation19 + $0x40] sm:$0xff]
    %v1060 = vld [vmem:[#allocation19 + $0x48] sm:$0xff]
    %v1061 = vld [vmem:[#allocation19 + $0x50] sm:$0xff]
    %v1062 = vld [vmem:[#allocation19 + $0x58] sm:$0xff]
    %v1063 = vld [vmem:[#allocation19 + $0x60] sm:$0xff]
    %v1064 = vld [vmem:[#allocation19 + $0x68] sm:$0xff]
    %v1065 = vld [vmem:[#allocation19 + $0x70] sm:$0xff]
    %v1066 = vld [vmem:[#allocation19 + $0x78] sm:$0xff]
    %1067 = vmatpush.msra.mxu0 %v1066
    %1068 = vmatpush.msra.mxu0 %v1065
    %1069 = vmatpush.msra.mxu0 %v1064
    %1070 = vmatpush.msra.mxu0 %v1063
    %1071 = vmatpush.msra.mxu0 %v1062
    %1072 = vmatpush.msra.mxu0 %v1061
    %1073 = vmatpush.msra.mxu0 %v1060
    %1074 = vmatpush.msra.mxu0 %v1059
    %1075 = vmatpush.msra.mxu0 %v1058
    %1076 = vmatpush.msra.mxu0 %v1057
    %1077 = vmatpush.msra.mxu0 %v1056
    %1078 = vmatpush.msra.mxu0 %v1055
    %1079 = vmatpush.msra.mxu0 %v1054
    %1080 = vmatpush.msra.mxu0 %v1053
    %1081 = vmatpush.msra.mxu0 %v1052
    %1082 = vmatpush.msra.mxu0 %v1051
    %1083 = vmatmul.f32.gmra.mxu0 %v360
    %v1084 = vpop.f32.mrf.mxu0
    %v1085 = vadd.f32 %v964, %v1084
    %1086 = vdwg.mxu0
    %v1087 = vtanh.pop %v1085
    %v1088 = vld [vmem:[#allocation20] sm:$0xff]
    %v1089 = vld [vmem:[#allocation20 + $0x8] sm:$0xff]
    %v1090 = vld [vmem:[#allocation20 + $0x10] sm:$0xff]
    %v1091 = vld [vmem:[#allocation20 + $0x18] sm:$0xff]
    %v1092 = vld [vmem:[#allocation20 + $0x20] sm:$0xff]
    %v1093 = vld [vmem:[#allocation20 + $0x28] sm:$0xff]
    %v1094 = vld [vmem:[#allocation20 + $0x30] sm:$0xff]
    %v1095 = vld [vmem:[#allocation20 + $0x38] sm:$0xff]
    %v1096 = vld [vmem:[#allocation20 + $0x40] sm:$0xff]
    %v1097 = vld [vmem:[#allocation20 + $0x48] sm:$0xff]
    %v1098 = vld [vmem:[#allocation20 + $0x50] sm:$0xff]
    %v1099 = vld [vmem:[#allocation20 + $0x58] sm:$0xff]
    %v1100 = vld [vmem:[#allocation20 + $0x60] sm:$0xff]
    %v1101 = vld [vmem:[#allocation20 + $0x68] sm:$0xff]
    %v1102 = vld [vmem:[#allocation20 + $0x70] sm:$0xff]
    %v1103 = vld [vmem:[#allocation20 + $0x78] sm:$0xff]
    %v1104 = vld [vmem:[%s17] sm:$0x1]
    %v1106 = vperm.slane %v1104, 0
    %1108 = vmatpush.msra.mxu0 %v1103
    %1109 = vmatpush.msra.mxu0 %v1102
    %1110 = vmatpush.msra.mxu0 %v1101
    %1111 = vmatpush.msra.mxu0 %v1100
    %1112 = vmatpush.msra.mxu0 %v1099
    %1113 = vmatpush.msra.mxu0 %v1098
    %1114 = vmatpush.msra.mxu0 %v1097
    %1115 = vmatpush.msra.mxu0 %v1096
    %1116 = vmatpush.msra.mxu0 %v1095
    %1117 = vmatpush.msra.mxu0 %v1094
    %1118 = vmatpush.msra.mxu0 %v1093
    %1119 = vmatpush.msra.mxu0 %v1092
    %1120 = vmatpush.msra.mxu0 %v1091
    %1121 = vmatpush.msra.mxu0 %v1090
    %1122 = vmatpush.msra.mxu0 %v1089
    %1123 = vmatpush.msra.mxu0 %v1088
    %1124 = vmatmul.f32.gmra.mxu0 %v1087
    %v1125 = vpop.f32.mrf.mxu0
    %v1126 = vadd.f32 %v1106, %v1125
    %1127 = vdwg.mxu0
    %v1128 = vmul.f32 %v1126, 1.442695
    %v1129 = vpow.pop %v1128
    %1130 = vst [vmem:[#allocation22] sm:$0xff] %v1129
    %v1131 = vld [vmem:[#allocation19] sm:$0xff]
    %v1132 = vld [vmem:[#allocation19 + $0x8] sm:$0xff]
    %v1133 = vld [vmem:[#allocation19 + $0x10] sm:$0xff]
    %v1134 = vld [vmem:[#allocation19 + $0x18] sm:$0xff]
    %v1135 = vld [vmem:[#allocation19 + $0x20] sm:$0xff]
    %v1136 = vld [vmem:[#allocation19 + $0x28] sm:$0xff]
    %v1137 = vld [vmem:[#allocation19 + $0x30] sm:$0xff]
    %v1138 = vld [vmem:[#allocation19 + $0x38] sm:$0xff]
    %v1139 = vld [vmem:[#allocation19 + $0x40] sm:$0xff]
    %v1140 = vld [vmem:[#allocation19 + $0x48] sm:$0xff]
    %v1141 = vld [vmem:[#allocation19 + $0x50] sm:$0xff]
    %v1142 = vld [vmem:[#allocation19 + $0x58] sm:$0xff]
    %v1143 = vld [vmem:[#allocation19 + $0x60] sm:$0xff]
    %v1144 = vld [vmem:[#allocation19 + $0x68] sm:$0xff]
    %v1145 = vld [vmem:[#allocation19 + $0x70] sm:$0xff]
    %v1146 = vld [vmem:[#allocation19 + $0x78] sm:$0xff]
    %1147 = vmatpush.msra.mxu0 %v1146
    %1148 = vmatpush.msra.mxu0 %v1145
    %1149 = vmatpush.msra.mxu0 %v1144
    %1150 = vmatpush.msra.mxu0 %v1143
    %1151 = vmatpush.msra.mxu0 %v1142
    %1152 = vmatpush.msra.mxu0 %v1141
    %1153 = vmatpush.msra.mxu0 %v1140
    %1154 = vmatpush.msra.mxu0 %v1139
    %1155 = vmatpush.msra.mxu0 %v1138
    %1156 = vmatpush.msra.mxu0 %v1137
    %1157 = vmatpush.msra.mxu0 %v1136
    %1158 = vmatpush.msra.mxu0 %v1135
    %1159 = vmatpush.msra.mxu0 %v1134
    %1160 = vmatpush.msra.mxu0 %v1133
    %1161 = vmatpush.msra.mxu0 %v1132
    %1162 = vmatpush.msra.mxu0 %v1131
    %1163 = vmatmul.f32.gmra.mxu0 %v1050
    %v1164 = vpop.f32.mrf.mxu0
    %v1165 = vadd.f32 %v964, %v1164
    %1166 = vdwg.mxu0
    %v1167 = vtanh.pop %v1165
    %v1168 = vld [vmem:[#allocation20] sm:$0xff]
    %v1169 = vld [vmem:[#allocation20 + $0x8] sm:$0xff]
    %v1170 = vld [vmem:[#allocation20 + $0x10] sm:$0xff]
    %v1171 = vld [vmem:[#allocation20 + $0x18] sm:$0xff]
    %v1172 = vld [vmem:[#allocation20 + $0x20] sm:$0xff]
    %v1173 = vld [vmem:[#allocation20 + $0x28] sm:$0xff]
    %v1174 = vld [vmem:[#allocation20 + $0x30] sm:$0xff]
    %v1175 = vld [vmem:[#allocation20 + $0x38] sm:$0xff]
    %v1176 = vld [vmem:[#allocation20 + $0x40] sm:$0xff]
    %v1177 = vld [vmem:[#allocation20 + $0x48] sm:$0xff]
    %v1178 = vld [vmem:[#allocation20 + $0x50] sm:$0xff]
    %v1179 = vld [vmem:[#allocation20 + $0x58] sm:$0xff]
    %v1180 = vld [vmem:[#allocation20 + $0x60] sm:$0xff]
    %v1181 = vld [vmem:[#allocation20 + $0x68] sm:$0xff]
    %v1182 = vld [vmem:[#allocation20 + $0x70] sm:$0xff]
    %v1183 = vld [vmem:[#allocation20 + $0x78] sm:$0xff]
    %v1184 = vld [vmem:[%s17] sm:$0x1]
    %v1186 = vperm.slane %v1184, 0
    %1188 = vmatpush.msra.mxu0 %v1183
    %1189 = vmatpush.msra.mxu0 %v1182
    %1190 = vmatpush.msra.mxu0 %v1181
    %1191 = vmatpush.msra.mxu0 %v1180
    %1192 = vmatpush.msra.mxu0 %v1179
    %1193 = vmatpush.msra.mxu0 %v1178
    %1194 = vmatpush.msra.mxu0 %v1177
    %1195 = vmatpush.msra.mxu0 %v1176
    %1196 = vmatpush.msra.mxu0 %v1175
    %1197 = vmatpush.msra.mxu0 %v1174
    %1198 = vmatpush.msra.mxu0 %v1173
    %1199 = vmatpush.msra.mxu0 %v1172
    %1200 = vmatpush.msra.mxu0 %v1171
    %1201 = vmatpush.msra.mxu0 %v1170
    %1202 = vmatpush.msra.mxu0 %v1169
    %1203 = vmatpush.msra.mxu0 %v1168
    %1204 = vmatmul.f32.gmra.mxu0 %v1167
    %v1205 = vpop.f32.mrf.mxu0
    %v1206 = vadd.f32 %v1186, %v1205
    %1207 = vdwg.mxu0
    %v1208 = vmul.f32 %v1206, 1.442695
    %v1209 = vpow.pop %v1208
    %1210 = vst [vmem:[#allocation25] sm:$0xff] %v1209
    // Predicated region
    $region122: #{tpu_custom_call.1} parent=1 // pred_check
      _
    $region123: #{tpu_custom_call.1} parent=1 // pred_check_branch
      %1212 = sbr.rel (0) target = $region125
    $region124: #{tpu_custom_call.1} parent=1 // pred_region
      %1214 = vsyncadd [#allocation4], 0
      %s1216 = sshll.u32 [#allocation22], 4
      %s1217 = int_to_ptr.vmem [resolvable:$true] %s1216
      %s1218 = sshll.u32 %s18, 4
      %s1219 = int_to_ptr.hbm [resolvable:$true] %s1218
      %1221 = dma.vmem_to_hbm [thread:$0]  %s1217, 128, %s1219, [#allocation4]
    $region125: #{tpu_custom_call.1} parent=1 // pred_fallthru
      _
    // Predicated region
    $region126: #{tpu_custom_call.1} parent=1 // pred_check
      _
    $region127: #{tpu_custom_call.1} parent=1 // pred_check_branch
      %1223 = sbr.rel (0) target = $region129
    $region128: #{tpu_custom_call.1} parent=1 // pred_region
      %1225 = vsyncadd [#allocation24], 0
      %s1227 = sshll.u32 [#allocation23], 4
      %s1228 = int_to_ptr.vmem [resolvable:$true] %s1227
      %s1229 = sshll.u32 %s19, 4
      %s1230 = int_to_ptr.hbm [resolvable:$true] %s1229
      %1232 = dma.vmem_to_hbm [thread:$0]  %s1228, 256, %s1230, [#allocation24]
    $region129: #{tpu_custom_call.1} parent=1 // pred_fallthru
      _
    // Predicated region
    $region130: #{tpu_custom_call.1} parent=1 // pred_check
      _
    $region131: #{tpu_custom_call.1} parent=1 // pred_check_branch
      %1234 = sbr.rel (0) target = $region133
    $region132: #{tpu_custom_call.1} parent=1 // pred_region
      %1236 = vsyncadd [#allocation24], 0
      %s1238 = sshll.u32 [#allocation25], 4
      %s1239 = int_to_ptr.vmem [resolvable:$true] %s1238
      %s1240 = sshll.u32 %s20, 4
      %s1241 = int_to_ptr.hbm [resolvable:$true] %s1240
      %1243 = dma.vmem_to_hbm [thread:$0]  %s1239, 128, %s1241, [#allocation24]
    $region133: #{tpu_custom_call.1} parent=1 // pred_fallthru
      _
    // Predicated region
    $region134: #{tpu_custom_call.1} parent=1 // pred_check
      _
    $region135: #{tpu_custom_call.1} parent=1 // pred_check_branch
      %1245 = sbr.rel (0) target = $region137
    $region136: #{tpu_custom_call.1} parent=1 // pred_region
      %1247 = vsyncadd [#allocation27], 0
      %s1249 = sshll.u32 [#allocation26], 4
      %s1250 = int_to_ptr.vmem [resolvable:$true] %s1249
      %s1251 = sshll.u32 %s21, 4
      %s1252 = int_to_ptr.hbm [resolvable:$true] %s1251
      %1254 = dma.vmem_to_hbm [thread:$0]  %s1250, 256, %s1252, [#allocation27]
    $region137: #{tpu_custom_call.1} parent=1 // pred_fallthru
      _
    // Predicated region
    $region138: #{tpu_custom_call.1} parent=1 // pred_check
      _
    $region139: #{tpu_custom_call.1} parent=1 // pred_check_branch
      %1256 = sbr.rel (0) target = $region141
    $region140: #{tpu_custom_call.1} parent=1 // pred_region
      %1258 = dma.done [#allocation4], 128
    $region141: #{tpu_custom_call.1} parent=1 // pred_fallthru
      _
    // Predicated region
    $region142: #{tpu_custom_call.1} parent=1 // pred_check
      _
    $region143: #{tpu_custom_call.1} parent=1 // pred_check_branch
      %1260 = sbr.rel (0) target = $region145
    $region144: #{tpu_custom_call.1} parent=1 // pred_region
      %1262 = dma.done [#allocation24], 256
    $region145: #{tpu_custom_call.1} parent=1 // pred_fallthru
      _
    // Predicated region
    $region146: #{tpu_custom_call.1} parent=1 // pred_check
      _
    $region147: #{tpu_custom_call.1} parent=1 // pred_check_branch
      %1264 = sbr.rel (0) target = $region149
    $region148: #{tpu_custom_call.1} parent=1 // pred_region
      %1266 = dma.done [#allocation24], 128
    $region149: #{tpu_custom_call.1} parent=1 // pred_fallthru
      _
    // Predicated region
    $region150: #{tpu_custom_call.1} parent=1 // pred_check
      _
    $region151: #{tpu_custom_call.1} parent=1 // pred_check_branch
      %1268 = sbr.rel (0) target = $region153
    $region152: #{tpu_custom_call.1} parent=1 // pred_region
      %1270 = dma.done [#allocation27], 256
    $region153: #{tpu_custom_call.1} parent=1 // pred_fallthru
      _
    %1271 = vsyncpa [#allocation3], 1
    %1272 = vsyncpa [#allocation6], 1
    %1273 = vsyncpa [#allocation9], 1
    %1274 = vsyncpa [#allocation12], 1
    %1275 = vsyncpa [#allocation15], 1
    %1276 = vsyncpa [#allocation18], 1
    %1277 = vsyncpa [#allocation21], 1
    %1278 = vsyncpa [#allocation4], 1
    %1279 = vsyncpa [#allocation24], 1
    %1280 = vsyncpa [#allocation27], 1

</llo_original>
